<compile_context>
chip_gen: v5e
topology: v5e:2x2
jax: 0.10.0
libtpu: 0.0.40
codegen_flags: <defaults>
</compile_context>

<pallas_src>
import jax
import jax.numpy as jnp
from jax.experimental import pallas as pl
from jax.experimental.pallas import tpu as pltpu

LN_EPS = 1e-5        # torch.nn.LayerNorm default
LANES = 128          # lane width: all packed slabs / the output use 128 lanes
WROW_ALIGN = 16      # bf16 sublane packing granularity -> keep weight row offsets aligned


# ----------------------------------------------------------------------------
# Kernel factory: the whole Encode -> Process(xSTEPS) -> Decode pass, gridless.
# `plans` holds only static Python ints (row offsets / widths into the slabs).
# ----------------------------------------------------------------------------
def make_kernel(plans, num_steps, N, E):

    def mlp(h, plan, w_ref, b_ref):
        layers = plan["layers"]
        for li, (off, din, dout, brow) in enumerate(layers):
            w = w_ref[off:off + din, 0:dout]                 # bf16 (din, dout)
            b = b_ref[brow:brow + 1, 0:dout]                 # f32  (1, dout)
            h = jnp.dot(h.astype(jnp.bfloat16), w,
                        preferred_element_type=jnp.float32) + b
            if li < len(layers) - 1:
                h = jnp.maximum(h, 0.0)                      # ReLU (not on last layer)
        if plan["ln"] is not None:
            grow, berow = plan["ln"]
            dout = layers[-1][2]
            gamma = b_ref[grow:grow + 1, 0:dout]
            beta = b_ref[berow:berow + 1, 0:dout]
            mean = jnp.mean(h, axis=-1, keepdims=True)
            var = jnp.mean(jnp.square(h - mean), axis=-1, keepdims=True)
            h = (h - mean) * jax.lax.rsqrt(var + LN_EPS) * gamma + beta
        return h

    def kernel(x_ref, e_ref, conn_ref, w_ref, b_ref, out_ref):
        # Connectivity slab: [S ; Dm ; A] stacked along rows, all f32 (exact).
        S = conn_ref[0:E, :]                  # (E, N) one-hot(src)
        Dm = conn_ref[E:2 * E, :]             # (E, N) one-hot(dst)
        A = conn_ref[2 * E:2 * E + N, :]      # (N, N) counts  A = Dm^T @ S

        # --- encode (GraphIndependent: MLP + LayerNorm on nodes and edges) ---
        x_lat = mlp(x_ref[...], plans["enc_node"], w_ref, b_ref)   # (N, L) f32
        e_lat = mlp(e_ref[...], plans["enc_edge"], w_ref, b_ref)   # (E, L) f32

        # --- process (InteractionNetwork steps, residuals in f32) ---
        for s in range(num_steps):
            # exact f32 gathers as one-hot matmuls (MXU)
            x_src = jnp.dot(S, x_lat, preferred_element_type=jnp.float32)   # (E, L)
            x_dst = jnp.dot(Dm, x_lat, preferred_element_type=jnp.float32)  # (E, L)
            edge_in = jnp.concatenate([x_src, x_dst, e_lat], axis=-1)       # (E, 3L)
            upd_e = mlp(edge_in, plans["edge_%d" % s], w_ref, b_ref)        # (E, L)

            # PyG default message() == x_j, 'add' aggregation at destinations
            agg = jnp.dot(A, x_lat, preferred_element_type=jnp.float32)     # (N, L)
            node_in = jnp.concatenate([x_lat, agg], axis=-1)                # (N, 2L)
            upd_n = mlp(node_in, plans["node_%d" % s], w_ref, b_ref)        # (N, L)

            x_lat = x_lat + upd_n
            e_lat = e_lat + upd_e

        # --- decode (block-diagonal merged decoder, 128-lane padded last layer) ---
        out_ref[...] = mlp(x_lat, plans["dec"], w_ref, b_ref).astype(out_ref.dtype)

    return kernel


# ----------------------------------------------------------------------------
# Parameter construction (deterministic, synthetic) — (din, dout) weight layout.
# ----------------------------------------------------------------------------
def init_mlp_params(key, din, hidden, num_hidden_layers, dout, layer_norm):
    dims = [din] + [hidden] * num_hidden_layers + [dout]
    keys = jax.random.split(key, len(dims) - 1)
    linears = []
    for k, di, do in zip(keys, dims[:-1], dims[1:]):
        w = jax.random.normal(k, (di, do), jnp.float32) * (float(di) ** -0.5)
        b = jnp.zeros((do,), jnp.float32)
        linears.append((w, b))
    ln = ((jnp.ones((dout,), jnp.float32), jnp.zeros((dout,), jnp.float32))
          if layer_norm else None)
    return {"linears": linears, "ln": ln}


def init_model_params(key, node_feat, edge_feat, latent, hidden, num_hidden_layers,
                      steps, output_size):
    keys = jax.random.split(key, 4 + 2 * steps)
    params = {
        "enc_node": init_mlp_params(keys[0], node_feat, hidden, num_hidden_layers, latent, True),
        "enc_edge": init_mlp_params(keys[1], edge_feat, hidden, num_hidden_layers, latent, True),
        "proc": [],
        "dec_acc": init_mlp_params(keys[2], latent, hidden, num_hidden_layers, output_size, False),
        "dec_temp": init_mlp_params(keys[3], latent, hidden, num_hidden_layers, 1, False),
    }
    for m in range(steps):
        params["proc"].append({
            "edge": init_mlp_params(keys[4 + 2 * m], 3 * latent, hidden, num_hidden_layers, latent, True),
            "node": init_mlp_params(keys[5 + 2 * m], 2 * latent, hidden, num_hidden_layers, latent, True),
        })
    return params


# ----------------------------------------------------------------------------
# Per-(graph, params) preprocessing — run ONCE, outside the jitted forward.
# ----------------------------------------------------------------------------
def merge_decoders(mlp_a, mlp_b):
    """Merge two same-depth MLPs into one block-diagonal MLP; output columns are
    [out_a | out_b]. Exact same math as running them separately."""
    merged = []
    for i, ((wa, ba), (wb, bb)) in enumerate(zip(mlp_a["linears"], mlp_b["linears"])):
        if i == 0:                                   # same input -> concat columns
            w = jnp.concatenate([wa, wb], axis=1)
        else:                                        # block-diagonal
            w = jnp.zeros((wa.shape[0] + wb.shape[0], wa.shape[1] + wb.shape[1]), wa.dtype)
            w = w.at[:wa.shape[0], :wa.shape[1]].set(wa)
            w = w.at[wa.shape[0]:, wa.shape[1]:].set(wb)
        merged.append((w, jnp.concatenate([ba, bb], axis=0)))
    return {"linears": merged, "ln": None}


def _pack_all(named_mlps):
    """Pack all MLPs into one bf16 weight slab and one f32 bias/LN slab (128 lanes).
    Returns (wslab, bslab, plans) where plans hold only static Python ints."""
    w_blocks, b_rows = [], []
    w_off = 0
    plans = {}

    def pack_linear(w, b):
        nonlocal w_off
        din, dout = w.shape
        pad_r = (-din) % WROW_ALIGN
        w_blocks.append(jnp.pad(w, ((0, pad_r), (0, LANES - dout))).astype(jnp.bfloat16))
        brow = len(b_rows)
        b_rows.append(jnp.pad(b.reshape(1, -1), ((0, 0), (0, LANES - dout))).astype(jnp.float32))
        layer = (w_off, din, dout, brow)
        w_off += din + pad_r
        return layer

    def pack_vec(v):
        row = len(b_rows)
        b_rows.append(jnp.pad(v.reshape(1, -1),
                              ((0, 0), (0, LANES - v.shape[0]))).astype(jnp.float32))
        return row

    for name, mlp in named_mlps:
        layers = [pack_linear(w, b) for (w, b) in mlp["linears"]]
        ln = None
        if mlp["ln"] is not None:
            gamma, beta = mlp["ln"]
            ln = (pack_vec(gamma), pack_vec(beta))
        plans[name] = {"layers": layers, "ln": ln}

    return jnp.concatenate(w_blocks, axis=0), jnp.concatenate(b_rows, axis=0), plans


def prepare_model(params, edge_index, num_nodes):
    """Build the connectivity slab and packed parameter slabs (loop-invariant)."""
    N = num_nodes
    src = edge_index[0].astype(jnp.int32)
    dst = edge_index[1].astype(jnp.int32)
    ids = jnp.arange(N, dtype=jnp.int32)
    S = (src[:, None] == ids[None, :]).astype(jnp.float32)     # (E, N) one-hot(src)
    Dm = (dst[:, None] == ids[None, :]).astype(jnp.float32)    # (E, N) one-hot(dst)
    A = jnp.dot(Dm.T, S)                                       # (N, N) f32 edge counts
    conn = jnp.concatenate([S, Dm, A], axis=0)                 # (2E + N, N)

    named = [("enc_node", params["enc_node"]), ("enc_edge", params["enc_edge"])]
    for i, step in enumerate(params["proc"]):
        named.append(("edge_%d" % i, step["edge"]))
        named.append(("node_%d" % i, step["node"]))
    named.append(("dec", merge_decoders(params["dec_acc"], params["dec_temp"])))

    wslab, bslab, plans = _pack_all(named)

    # Final decoder layer writes the full 128-lane padded slab (extra columns are
    # zero weights / zero bias => zeros), so the single output store is lane-dense.
    off, din, _dout, brow = plans["dec"]["layers"][-1]
    plans["dec"]["layers"][-1] = (off, din, LANES, brow)
    return conn, wslab, bslab, plans


# ----------------------------------------------------------------------------
# Forward pass wrapper (single gridless pallas_call, 5 inputs -> 1 output)
# ----------------------------------------------------------------------------
def build_forward(plans, N, E, num_steps, out_acc, out_temp):
    kernel = make_kernel(plans, num_steps, N, E)
    vmem = pl.BlockSpec(memory_space=pltpu.MemorySpace.VMEM)

    @jax.jit
    def forward(x, edge_attr, conn, wslab, bslab):
        # Working set < 1 MiB; the default scoped-VMEM limit is ample on all
        # generations (the previous explicit 64 MiB limit was removed).
        out = pl.pallas_call(
            kernel,
            out_shape=jax.ShapeDtypeStruct((N, LANES), jnp.float32),
            in_specs=[vmem] * 5,
            out_specs=vmem,
        )(x.astype(jnp.float32), edge_attr.astype(jnp.float32), conn, wslab, bslab)
        return {"acceleration": out[:, :out_acc],
                "temp_rate": out[:, out_acc:out_acc + out_temp]}

    return forward


# ----------------------------------------------------------------------------
# Main
# ----------------------------------------------------------------------------
if __name__ == "__main__":
    LATENT = 32
    HIDDEN = 32
    NUM_HIDDEN_LAYERS = 2          # build_mlp: Linear->ReLU x2, then final Linear
    STEPS = 2                      # num_message_passing_steps
    OUTPUT_SIZE = 3                # 3-D acceleration

    N_NODES = 64
    N_EDGES = 128
    NODE_FEAT = 16
    EDGE_FEAT = 8

    key = jax.random.PRNGKey(0)
    k_x, k_e, k_idx, k_params = jax.random.split(key, 4)

    x = jax.random.normal(k_x, (N_NODES, NODE_FEAT), jnp.float32)
    edge_attr = jax.random.normal(k_e, (N_EDGES, EDGE_FEAT), jnp.float32)
    edge_index = jax.random.randint(k_idx, (2, N_EDGES), 0, N_NODES, dtype=jnp.int32)

    params = init_model_params(k_params, NODE_FEAT, EDGE_FEAT, LATENT, HIDDEN,
                               NUM_HIDDEN_LAYERS, STEPS, OUTPUT_SIZE)

    # Hoisted preprocessing: one-hot gather matrices, decoder merge, slab packing.
    conn, wslab, bslab, plans = prepare_model(params, edge_index, N_NODES)
    fwd = build_forward(plans, N_NODES, N_EDGES, STEPS, OUTPUT_SIZE, 1)

    out = fwd(x, edge_attr, conn, wslab, bslab)
    jax.block_until_ready(out)

    assert out["acceleration"].shape == (N_NODES, OUTPUT_SIZE)
    assert out["temp_rate"].shape == (N_NODES, 1)
    print("KERNEL_OK")
</pallas_src>

<mosaic_0001>
module attributes {stable_mosaic.version = 11 : i64} {
  func.func @kernel(%arg0: memref<64x16xf32, #tpu.memory_space<vmem>>, %arg1: memref<128x8xf32, #tpu.memory_space<vmem>>, %arg2: memref<320x64xf32, #tpu.memory_space<vmem>>, %arg3: memref<896x128xbf16, #tpu.memory_space<vmem>>, %arg4: memref<33x128xf32, #tpu.memory_space<vmem>>, %arg5: memref<64x128xf32, #tpu.memory_space<vmem>>) attributes {dimension_semantics = [], scalar_prefetch = 0 : i64, scratch_operands = 0 : i64, tpu.core_type = #tpu.core_type<tc>} {
    %c256 = arith.constant 256 : index
    %c0 = arith.constant 0 : index
    %0 = vector.load %arg2[%c256, %c0] : memref<320x64xf32, #tpu.memory_space<vmem>>, vector<64x64xf32>
    %c0_0 = arith.constant 0 : index
    %c0_1 = arith.constant 0 : index
    %1 = vector.load %arg0[%c0_0, %c0_1] : memref<64x16xf32, #tpu.memory_space<vmem>>, vector<64x16xf32>
    %c0_2 = arith.constant 0 : index
    %c0_3 = arith.constant 0 : index
    %2 = vector.load %arg3[%c0_2, %c0_3] : memref<896x128xbf16, #tpu.memory_space<vmem>>, vector<16x32xbf16>
    %c0_4 = arith.constant 0 : index
    %c0_5 = arith.constant 0 : index
    %3 = vector.load %arg4[%c0_4, %c0_5] : memref<33x128xf32, #tpu.memory_space<vmem>>, vector<1x32xf32>
    %4 = arith.truncf %1 : vector<64x16xf32> to vector<64x16xbf16>
    %cst = arith.constant dense<0.000000e+00> : vector<64x32xf32>
    %5 = tpu.matmul %4, %2, %cst {dimension_numbers = #tpu.dot_dimension_numbers<[1], [0], [0], [1], [0, 0, 1, 1], [], []>} : vector<64x16xbf16>, vector<16x32xbf16>, vector<64x32xf32> -> vector<64x32xf32>
    %6 = vector.broadcast %3 : vector<1x32xf32> to vector<64x32xf32>
    %7 = arith.addf %5, %6 : vector<64x32xf32>
    %cst_6 = arith.constant 0.000000e+00 : f32
    %8 = vector.broadcast %cst_6 : f32 to vector<64x32xf32>
    %9 = arith.maximumf %7, %8 : vector<64x32xf32>
    %c16 = arith.constant 16 : index
    %c0_7 = arith.constant 0 : index
    %10 = vector.load %arg3[%c16, %c0_7] : memref<896x128xbf16, #tpu.memory_space<vmem>>, vector<32x32xbf16>
    %c1 = arith.constant 1 : index
    %c0_8 = arith.constant 0 : index
    %11 = vector.load %arg4[%c1, %c0_8] : memref<33x128xf32, #tpu.memory_space<vmem>>, vector<1x32xf32>
    %12 = arith.truncf %9 : vector<64x32xf32> to vector<64x32xbf16>
    %cst_9 = arith.constant dense<0.000000e+00> : vector<64x32xf32>
    %13 = tpu.matmul %12, %10, %cst_9 {dimension_numbers = #tpu.dot_dimension_numbers<[1], [0], [0], [1], [0, 0, 1, 1], [], []>} : vector<64x32xbf16>, vector<32x32xbf16>, vector<64x32xf32> -> vector<64x32xf32>
    %14 = vector.broadcast %11 : vector<1x32xf32> to vector<64x32xf32>
    %15 = arith.addf %13, %14 : vector<64x32xf32>
    %cst_10 = arith.constant 0.000000e+00 : f32
    %16 = vector.broadcast %cst_10 : f32 to vector<64x32xf32>
    %17 = arith.maximumf %15, %16 : vector<64x32xf32>
    %c48 = arith.constant 48 : index
    %c0_11 = arith.constant 0 : index
    %18 = vector.load %arg3[%c48, %c0_11] : memref<896x128xbf16, #tpu.memory_space<vmem>>, vector<32x32xbf16>
    %c2 = arith.constant 2 : index
    %c0_12 = arith.constant 0 : index
    %19 = vector.load %arg4[%c2, %c0_12] : memref<33x128xf32, #tpu.memory_space<vmem>>, vector<1x32xf32>
    %20 = arith.truncf %17 : vector<64x32xf32> to vector<64x32xbf16>
    %cst_13 = arith.constant dense<0.000000e+00> : vector<64x32xf32>
    %21 = tpu.matmul %20, %18, %cst_13 {dimension_numbers = #tpu.dot_dimension_numbers<[1], [0], [0], [1], [0, 0, 1, 1], [], []>} : vector<64x32xbf16>, vector<32x32xbf16>, vector<64x32xf32> -> vector<64x32xf32>
    %22 = vector.broadcast %19 : vector<1x32xf32> to vector<64x32xf32>
    %23 = arith.addf %21, %22 : vector<64x32xf32>
    %c3 = arith.constant 3 : index
    %c0_14 = arith.constant 0 : index
    %24 = vector.load %arg4[%c3, %c0_14] : memref<33x128xf32, #tpu.memory_space<vmem>>, vector<1x32xf32>
    %c4 = arith.constant 4 : index
    %c0_15 = arith.constant 0 : index
    %25 = vector.load %arg4[%c4, %c0_15] : memref<33x128xf32, #tpu.memory_space<vmem>>, vector<1x32xf32>
    %cst_16 = arith.constant dense<0.000000e+00> : vector<64xf32>
    %26 = vector.multi_reduction <add>, %23, %cst_16 [1] : vector<64x32xf32> to vector<64xf32>
    %27 = vector.shape_cast %26 : vector<64xf32> to vector<64x1xf32>
    %cst_17 = arith.constant 3.200000e+01 : f32
    %28 = vector.broadcast %cst_17 : f32 to vector<64x1xf32>
    %29 = arith.divf %27, %28 : vector<64x1xf32>
    %30 = vector.broadcast %29 : vector<64x1xf32> to vector<64x32xf32>
    %31 = arith.subf %23, %30 : vector<64x32xf32>
    %32 = arith.mulf %31, %31 : vector<64x32xf32>
    %cst_18 = arith.constant dense<0.000000e+00> : vector<64xf32>
    %33 = vector.multi_reduction <add>, %32, %cst_18 [1] : vector<64x32xf32> to vector<64xf32>
    %34 = vector.shape_cast %33 : vector<64xf32> to vector<64x1xf32>
    %cst_19 = arith.constant 3.200000e+01 : f32
    %35 = vector.broadcast %cst_19 : f32 to vector<64x1xf32>
    %36 = arith.divf %34, %35 : vector<64x1xf32>
    %37 = vector.broadcast %29 : vector<64x1xf32> to vector<64x32xf32>
    %38 = arith.subf %23, %37 : vector<64x32xf32>
    %cst_20 = arith.constant 9.99999974E-6 : f32
    %39 = vector.broadcast %cst_20 : f32 to vector<64x1xf32>
    %40 = arith.addf %36, %39 : vector<64x1xf32>
    %41 = math.rsqrt %40 : vector<64x1xf32>
    %42 = vector.broadcast %41 : vector<64x1xf32> to vector<64x32xf32>
    %43 = arith.mulf %38, %42 : vector<64x32xf32>
    %44 = vector.broadcast %24 : vector<1x32xf32> to vector<64x32xf32>
    %45 = arith.mulf %43, %44 : vector<64x32xf32>
    %46 = vector.broadcast %25 : vector<1x32xf32> to vector<64x32xf32>
    %47 = arith.addf %45, %46 : vector<64x32xf32>
    %cst_21 = arith.constant dense<0.000000e+00> : vector<64x32xf32>
    %48 = tpu.matmul %0, %47, %cst_21 {dimension_numbers = #tpu.dot_dimension_numbers<[1], [0], [0], [1], [0, 0, 1, 1], [], []>} : vector<64x64xf32>, vector<64x32xf32>, vector<64x32xf32> -> vector<64x32xf32>
    %49 = tpu.concatenate %47, %48 in 1 : vector<64x32xf32>, vector<64x32xf32> -> vector<64x64xf32>
    %c320 = arith.constant 320 : index
    %c0_22 = arith.constant 0 : index
    %50 = vector.load %arg3[%c320, %c0_22] : memref<896x128xbf16, #tpu.memory_space<vmem>>, vector<64x32xbf16>
    %c15 = arith.constant 15 : index
    %c0_23 = arith.constant 0 : index
    %51 = vector.load %arg4[%c15, %c0_23] : memref<33x128xf32, #tpu.memory_space<vmem>>, vector<1x32xf32>
    %52 = arith.truncf %49 : vector<64x64xf32> to vector<64x64xbf16>
    %cst_24 = arith.constant dense<0.000000e+00> : vector<64x32xf32>
    %53 = tpu.matmul %52, %50, %cst_24 {dimension_numbers = #tpu.dot_dimension_numbers<[1], [0], [0], [1], [0, 0, 1, 1], [], []>} : vector<64x64xbf16>, vector<64x32xbf16>, vector<64x32xf32> -> vector<64x32xf32>
    %54 = vector.broadcast %51 : vector<1x32xf32> to vector<64x32xf32>
    %55 = arith.addf %53, %54 : vector<64x32xf32>
    %cst_25 = arith.constant 0.000000e+00 : f32
    %56 = vector.broadcast %cst_25 : f32 to vector<64x32xf32>
    %57 = arith.maximumf %55, %56 : vector<64x32xf32>
    %c384 = arith.constant 384 : index
    %c0_26 = arith.constant 0 : index
    %58 = vector.load %arg3[%c384, %c0_26] : memref<896x128xbf16, #tpu.memory_space<vmem>>, vector<32x32xbf16>
    %c16_27 = arith.constant 16 : index
    %c0_28 = arith.constant 0 : index
    %59 = vector.load %arg4[%c16_27, %c0_28] : memref<33x128xf32, #tpu.memory_space<vmem>>, vector<1x32xf32>
    %60 = arith.truncf %57 : vector<64x32xf32> to vector<64x32xbf16>
    %cst_29 = arith.constant dense<0.000000e+00> : vector<64x32xf32>
    %61 = tpu.matmul %60, %58, %cst_29 {dimension_numbers = #tpu.dot_dimension_numbers<[1], [0], [0], [1], [0, 0, 1, 1], [], []>} : vector<64x32xbf16>, vector<32x32xbf16>, vector<64x32xf32> -> vector<64x32xf32>
    %62 = vector.broadcast %59 : vector<1x32xf32> to vector<64x32xf32>
    %63 = arith.addf %61, %62 : vector<64x32xf32>
    %cst_30 = arith.constant 0.000000e+00 : f32
    %64 = vector.broadcast %cst_30 : f32 to vector<64x32xf32>
    %65 = arith.maximumf %63, %64 : vector<64x32xf32>
    %c416 = arith.constant 416 : index
    %c0_31 = arith.constant 0 : index
    %66 = vector.load %arg3[%c416, %c0_31] : memref<896x128xbf16, #tpu.memory_space<vmem>>, vector<32x32xbf16>
    %c17 = arith.constant 17 : index
    %c0_32 = arith.constant 0 : index
    %67 = vector.load %arg4[%c17, %c0_32] : memref<33x128xf32, #tpu.memory_space<vmem>>, vector<1x32xf32>
    %68 = arith.truncf %65 : vector<64x32xf32> to vector<64x32xbf16>
    %cst_33 = arith.constant dense<0.000000e+00> : vector<64x32xf32>
    %69 = tpu.matmul %68, %66, %cst_33 {dimension_numbers = #tpu.dot_dimension_numbers<[1], [0], [0], [1], [0, 0, 1, 1], [], []>} : vector<64x32xbf16>, vector<32x32xbf16>, vector<64x32xf32> -> vector<64x32xf32>
    %70 = vector.broadcast %67 : vector<1x32xf32> to vector<64x32xf32>
    %71 = arith.addf %69, %70 : vector<64x32xf32>
    %c18 = arith.constant 18 : index
    %c0_34 = arith.constant 0 : index
    %72 = vector.load %arg4[%c18, %c0_34] : memref<33x128xf32, #tpu.memory_space<vmem>>, vector<1x32xf32>
    %c19 = arith.constant 19 : index
    %c0_35 = arith.constant 0 : index
    %73 = vector.load %arg4[%c19, %c0_35] : memref<33x128xf32, #tpu.memory_space<vmem>>, vector<1x32xf32>
    %cst_36 = arith.constant dense<0.000000e+00> : vector<64xf32>
    %74 = vector.multi_reduction <add>, %71, %cst_36 [1] : vector<64x32xf32> to vector<64xf32>
    %75 = vector.shape_cast %74 : vector<64xf32> to vector<64x1xf32>
    %cst_37 = arith.constant 3.200000e+01 : f32
    %76 = vector.broadcast %cst_37 : f32 to vector<64x1xf32>
    %77 = arith.divf %75, %76 : vector<64x1xf32>
    %78 = vector.broadcast %77 : vector<64x1xf32> to vector<64x32xf32>
    %79 = arith.subf %71, %78 : vector<64x32xf32>
    %80 = arith.mulf %79, %79 : vector<64x32xf32>
    %cst_38 = arith.constant dense<0.000000e+00> : vector<64xf32>
    %81 = vector.multi_reduction <add>, %80, %cst_38 [1] : vector<64x32xf32> to vector<64xf32>
    %82 = vector.shape_cast %81 : vector<64xf32> to vector<64x1xf32>
    %cst_39 = arith.constant 3.200000e+01 : f32
    %83 = vector.broadcast %cst_39 : f32 to vector<64x1xf32>
    %84 = arith.divf %82, %83 : vector<64x1xf32>
    %85 = vector.broadcast %77 : vector<64x1xf32> to vector<64x32xf32>
    %86 = arith.subf %71, %85 : vector<64x32xf32>
    %cst_40 = arith.constant 9.99999974E-6 : f32
    %87 = vector.broadcast %cst_40 : f32 to vector<64x1xf32>
    %88 = arith.addf %84, %87 : vector<64x1xf32>
    %89 = math.rsqrt %88 : vector<64x1xf32>
    %90 = vector.broadcast %89 : vector<64x1xf32> to vector<64x32xf32>
    %91 = arith.mulf %86, %90 : vector<64x32xf32>
    %92 = vector.broadcast %72 : vector<1x32xf32> to vector<64x32xf32>
    %93 = arith.mulf %91, %92 : vector<64x32xf32>
    %94 = vector.broadcast %73 : vector<1x32xf32> to vector<64x32xf32>
    %95 = arith.addf %93, %94 : vector<64x32xf32>
    %96 = arith.addf %47, %95 : vector<64x32xf32>
    %cst_41 = arith.constant dense<0.000000e+00> : vector<64x32xf32>
    %97 = tpu.matmul %0, %96, %cst_41 {dimension_numbers = #tpu.dot_dimension_numbers<[1], [0], [0], [1], [0, 0, 1, 1], [], []>} : vector<64x64xf32>, vector<64x32xf32>, vector<64x32xf32> -> vector<64x32xf32>
    %98 = tpu.concatenate %96, %97 in 1 : vector<64x32xf32>, vector<64x32xf32> -> vector<64x64xf32>
    %c608 = arith.constant 608 : index
    %c0_42 = arith.constant 0 : index
    %99 = vector.load %arg3[%c608, %c0_42] : memref<896x128xbf16, #tpu.memory_space<vmem>>, vector<64x32xbf16>
    %c25 = arith.constant 25 : index
    %c0_43 = arith.constant 0 : index
    %100 = vector.load %arg4[%c25, %c0_43] : memref<33x128xf32, #tpu.memory_space<vmem>>, vector<1x32xf32>
    %101 = arith.truncf %98 : vector<64x64xf32> to vector<64x64xbf16>
    %cst_44 = arith.constant dense<0.000000e+00> : vector<64x32xf32>
    %102 = tpu.matmul %101, %99, %cst_44 {dimension_numbers = #tpu.dot_dimension_numbers<[1], [0], [0], [1], [0, 0, 1, 1], [], []>} : vector<64x64xbf16>, vector<64x32xbf16>, vector<64x32xf32> -> vector<64x32xf32>
    %103 = vector.broadcast %100 : vector<1x32xf32> to vector<64x32xf32>
    %104 = arith.addf %102, %103 : vector<64x32xf32>
    %cst_45 = arith.constant 0.000000e+00 : f32
    %105 = vector.broadcast %cst_45 : f32 to vector<64x32xf32>
    %106 = arith.maximumf %104, %105 : vector<64x32xf32>
    %c672 = arith.constant 672 : index
    %c0_46 = arith.constant 0 : index
    %107 = vector.load %arg3[%c672, %c0_46] : memref<896x128xbf16, #tpu.memory_space<vmem>>, vector<32x32xbf16>
    %c26 = arith.constant 26 : index
    %c0_47 = arith.constant 0 : index
    %108 = vector.load %arg4[%c26, %c0_47] : memref<33x128xf32, #tpu.memory_space<vmem>>, vector<1x32xf32>
    %109 = arith.truncf %106 : vector<64x32xf32> to vector<64x32xbf16>
    %cst_48 = arith.constant dense<0.000000e+00> : vector<64x32xf32>
    %110 = tpu.matmul %109, %107, %cst_48 {dimension_numbers = #tpu.dot_dimension_numbers<[1], [0], [0], [1], [0, 0, 1, 1], [], []>} : vector<64x32xbf16>, vector<32x32xbf16>, vector<64x32xf32> -> vector<64x32xf32>
    %111 = vector.broadcast %108 : vector<1x32xf32> to vector<64x32xf32>
    %112 = arith.addf %110, %111 : vector<64x32xf32>
    %cst_49 = arith.constant 0.000000e+00 : f32
    %113 = vector.broadcast %cst_49 : f32 to vector<64x32xf32>
    %114 = arith.maximumf %112, %113 : vector<64x32xf32>
    %c704 = arith.constant 704 : index
    %c0_50 = arith.constant 0 : index
    %115 = vector.load %arg3[%c704, %c0_50] : memref<896x128xbf16, #tpu.memory_space<vmem>>, vector<32x32xbf16>
    %c27 = arith.constant 27 : index
    %c0_51 = arith.constant 0 : index
    %116 = vector.load %arg4[%c27, %c0_51] : memref<33x128xf32, #tpu.memory_space<vmem>>, vector<1x32xf32>
    %117 = arith.truncf %114 : vector<64x32xf32> to vector<64x32xbf16>
    %cst_52 = arith.constant dense<0.000000e+00> : vector<64x32xf32>
    %118 = tpu.matmul %117, %115, %cst_52 {dimension_numbers = #tpu.dot_dimension_numbers<[1], [0], [0], [1], [0, 0, 1, 1], [], []>} : vector<64x32xbf16>, vector<32x32xbf16>, vector<64x32xf32> -> vector<64x32xf32>
    %119 = vector.broadcast %116 : vector<1x32xf32> to vector<64x32xf32>
    %120 = arith.addf %118, %119 : vector<64x32xf32>
    %c28 = arith.constant 28 : index
    %c0_53 = arith.constant 0 : index
    %121 = vector.load %arg4[%c28, %c0_53] : memref<33x128xf32, #tpu.memory_space<vmem>>, vector<1x32xf32>
    %c29 = arith.constant 29 : index
    %c0_54 = arith.constant 0 : index
    %122 = vector.load %arg4[%c29, %c0_54] : memref<33x128xf32, #tpu.memory_space<vmem>>, vector<1x32xf32>
    %cst_55 = arith.constant dense<0.000000e+00> : vector<64xf32>
    %123 = vector.multi_reduction <add>, %120, %cst_55 [1] : vector<64x32xf32> to vector<64xf32>
    %124 = vector.shape_cast %123 : vector<64xf32> to vector<64x1xf32>
    %cst_56 = arith.constant 3.200000e+01 : f32
    %125 = vector.broadcast %cst_56 : f32 to vector<64x1xf32>
    %126 = arith.divf %124, %125 : vector<64x1xf32>
    %127 = vector.broadcast %126 : vector<64x1xf32> to vector<64x32xf32>
    %128 = arith.subf %120, %127 : vector<64x32xf32>
    %129 = arith.mulf %128, %128 : vector<64x32xf32>
    %cst_57 = arith.constant dense<0.000000e+00> : vector<64xf32>
    %130 = vector.multi_reduction <add>, %129, %cst_57 [1] : vector<64x32xf32> to vector<64xf32>
    %131 = vector.shape_cast %130 : vector<64xf32> to vector<64x1xf32>
    %cst_58 = arith.constant 3.200000e+01 : f32
    %132 = vector.broadcast %cst_58 : f32 to vector<64x1xf32>
    %133 = arith.divf %131, %132 : vector<64x1xf32>
    %134 = vector.broadcast %126 : vector<64x1xf32> to vector<64x32xf32>
    %135 = arith.subf %120, %134 : vector<64x32xf32>
    %cst_59 = arith.constant 9.99999974E-6 : f32
    %136 = vector.broadcast %cst_59 : f32 to vector<64x1xf32>
    %137 = arith.addf %133, %136 : vector<64x1xf32>
    %138 = math.rsqrt %137 : vector<64x1xf32>
    %139 = vector.broadcast %138 : vector<64x1xf32> to vector<64x32xf32>
    %140 = arith.mulf %135, %139 : vector<64x32xf32>
    %141 = vector.broadcast %121 : vector<1x32xf32> to vector<64x32xf32>
    %142 = arith.mulf %140, %141 : vector<64x32xf32>
    %143 = vector.broadcast %122 : vector<1x32xf32> to vector<64x32xf32>
    %144 = arith.addf %142, %143 : vector<64x32xf32>
    %145 = arith.addf %96, %144 : vector<64x32xf32>
    %c736 = arith.constant 736 : index
    %c0_60 = arith.constant 0 : index
    %146 = vector.load %arg3[%c736, %c0_60] : memref<896x128xbf16, #tpu.memory_space<vmem>>, vector<32x64xbf16>
    %c30 = arith.constant 30 : index
    %c0_61 = arith.constant 0 : index
    %147 = vector.load %arg4[%c30, %c0_61] : memref<33x128xf32, #tpu.memory_space<vmem>>, vector<1x64xf32>
    %148 = arith.truncf %145 : vector<64x32xf32> to vector<64x32xbf16>
    %cst_62 = arith.constant dense<0.000000e+00> : vector<64x64xf32>
    %149 = tpu.matmul %148, %146, %cst_62 {dimension_numbers = #tpu.dot_dimension_numbers<[1], [0], [0], [1], [0, 0, 1, 1], [], []>} : vector<64x32xbf16>, vector<32x64xbf16>, vector<64x64xf32> -> vector<64x64xf32>
    %150 = vector.broadcast %147 : vector<1x64xf32> to vector<64x64xf32>
    %151 = arith.addf %149, %150 : vector<64x64xf32>
    %cst_63 = arith.constant 0.000000e+00 : f32
    %152 = vector.broadcast %cst_63 : f32 to vector<64x64xf32>
    %153 = arith.maximumf %151, %152 : vector<64x64xf32>
    %c768 = arith.constant 768 : index
    %c0_64 = arith.constant 0 : index
    %154 = vector.load %arg3[%c768, %c0_64] : memref<896x128xbf16, #tpu.memory_space<vmem>>, vector<64x64xbf16>
    %c31 = arith.constant 31 : index
    %c0_65 = arith.constant 0 : index
    %155 = vector.load %arg4[%c31, %c0_65] : memref<33x128xf32, #tpu.memory_space<vmem>>, vector<1x64xf32>
    %156 = arith.truncf %153 : vector<64x64xf32> to vector<64x64xbf16>
    %cst_66 = arith.constant dense<0.000000e+00> : vector<64x64xf32>
    %157 = tpu.matmul %156, %154, %cst_66 {dimension_numbers = #tpu.dot_dimension_numbers<[1], [0], [0], [1], [0, 0, 1, 1], [], []>} : vector<64x64xbf16>, vector<64x64xbf16>, vector<64x64xf32> -> vector<64x64xf32>
    %158 = vector.broadcast %155 : vector<1x64xf32> to vector<64x64xf32>
    %159 = arith.addf %157, %158 : vector<64x64xf32>
    %cst_67 = arith.constant 0.000000e+00 : f32
    %160 = vector.broadcast %cst_67 : f32 to vector<64x64xf32>
    %161 = arith.maximumf %159, %160 : vector<64x64xf32>
    %c832 = arith.constant 832 : index
    %c0_68 = arith.constant 0 : index
    %162 = vector.load %arg3[%c832, %c0_68] : memref<896x128xbf16, #tpu.memory_space<vmem>>, vector<64x128xbf16>
    %c32 = arith.constant 32 : index
    %c0_69 = arith.constant 0 : index
    %163 = vector.load %arg4[%c32, %c0_69] : memref<33x128xf32, #tpu.memory_space<vmem>>, vector<1x128xf32>
    %164 = arith.truncf %161 : vector<64x64xf32> to vector<64x64xbf16>
    %cst_70 = arith.constant dense<0.000000e+00> : vector<64x128xf32>
    %165 = tpu.matmul %164, %162, %cst_70 {dimension_numbers = #tpu.dot_dimension_numbers<[1], [0], [0], [1], [0, 0, 1, 1], [], []>} : vector<64x64xbf16>, vector<64x128xbf16>, vector<64x128xf32> -> vector<64x128xf32>
    %166 = vector.broadcast %163 : vector<1x128xf32> to vector<64x128xf32>
    %167 = arith.addf %165, %166 : vector<64x128xf32>
    %c0_71 = arith.constant 0 : index
    %c0_72 = arith.constant 0 : index
    %168 = vector.load %arg5[%c0_71, %c0_72] : memref<64x128xf32, #tpu.memory_space<vmem>>, vector<64x128xf32>
    tpu.vector_store %arg5[%c0_71, %c0_72], %167 {strides = array<i32>} : memref<64x128xf32, #tpu.memory_space<vmem>>, vector<64x128xf32>,
    return
  }
}

</mosaic_0001>

<llo_original>
// kernel: forward.1
$region0: #{forward.1}
  #allocation0 [shape = 'u32[]', space=smem, size = 0x4, offset = 0x4, fixed_abs, tag = 'smem constant byte address 0x4 - core index']
  #allocation1 [shape = 'u32[72,128]{1,0:T(1,128)}', space=vmem, size = 0x9000, scoped, tag = 'internal scratch']
  %s0 = inlined_call_operand.vmem [shape: f32[64,16], index: 0, kind: input, shape index: {}]
  %s1 = inlined_call_operand.vmem [shape: f32[128,8], index: 1, kind: input, shape index: {}]
  %s2 = inlined_call_operand.vmem [shape: f32[320,64], index: 2, kind: input, shape index: {}]
  %s3 = inlined_call_operand.vmem [shape: bf16[896,128], index: 3, kind: input, shape index: {}]
  %s4 = inlined_call_operand.vmem [shape: f32[33,128], index: 4, kind: input, shape index: {}]
  %s5 = inlined_call_operand.vmem [shape: f32[64,128], index: 5, kind: output, shape index: {}]
  %s6 = sld [smem:[#allocation0]]
  $region30: #{forward.1} parent=0
    _
  %s8 = ssub.s32 1, %s6
  %s9 = scalar_select 0, %s8, %s6
  // Predicated region
  $region2: #{forward.1} parent=0 // pred_check
    _
  $region3: #{forward.1} parent=0 // pred_check_branch
    %11 = sbr.rel (0) target = $region5
  $region4: #{forward.1} parent=0 // pred_region
    _
  $region5: #{forward.1} parent=0 // pred_fallthru
    _
  // Predicated region
  $region6: #{forward.1} parent=0 // pred_check
    _
  $region7: #{forward.1} parent=0 // pred_check_branch
    %13 = sbr.rel (0) target = $region9
  $region8: #{forward.1} parent=0 // pred_region
    _
  $region9: #{forward.1} parent=0 // pred_fallthru
    _
  // Predicated region
  $region10: #{forward.1} parent=0 // pred_check
    _
  $region11: #{forward.1} parent=0 // pred_check_branch
    %15 = sbr.rel (0) target = $region13
  $region12: #{forward.1} parent=0 // pred_region
    _
  $region13: #{forward.1} parent=0 // pred_fallthru
    _
  // Predicated region
  $region14: #{forward.1} parent=0 // pred_check
    _
  $region15: #{forward.1} parent=0 // pred_check_branch
    %17 = sbr.rel (0) target = $region17
  $region16: #{forward.1} parent=0 // pred_region
    _
  $region17: #{forward.1} parent=0 // pred_fallthru
    _
  // Predicated region
  $region18: #{forward.1} parent=0 // pred_check
    _
  $region19: #{forward.1} parent=0 // pred_check_branch
    %19 = sbr.rel (0) target = $region21
  $region20: #{forward.1} parent=0 // pred_region
    _
  $region21: #{forward.1} parent=0 // pred_fallthru
    _
  %v21 = vld [vmem:[%s2 + $0x100] sm:$0xff]
  %v22 = vld [vmem:[%s2 + $0x108] sm:$0xff]
  %v23 = vld [vmem:[%s2 + $0x110] sm:$0xff]
  %v24 = vld [vmem:[%s2 + $0x118] sm:$0xff]
  %v25 = vld [vmem:[%s2 + $0x120] sm:$0xff]
  %v26 = vld [vmem:[%s2 + $0x128] sm:$0xff]
  %v27 = vld [vmem:[%s2 + $0x130] sm:$0xff]
  %v28 = vld [vmem:[%s2 + $0x138] sm:$0xff]
  %v29 = vld [vmem:[%s0] sm:$0xff]
  %v30 = vld [vmem:[%s0 + $0x8] sm:$0xff]
  %v31 = vld [vmem:[%s0 + $0x10] sm:$0xff]
  %v32 = vld [vmem:[%s0 + $0x18] sm:$0xff]
  %v33 = vld [vmem:[%s0 + $0x20] sm:$0xff]
  %v34 = vld [vmem:[%s0 + $0x28] sm:$0xff]
  %v35 = vld [vmem:[%s0 + $0x30] sm:$0xff]
  %v36 = vld [vmem:[%s0 + $0x38] sm:$0xff]
  %v37 = vld [vmem:[%s3] sm:$0xf]
  %v38 = vld [vmem:[%s3 + $0x4] sm:$0xf]
  %v39 = vld [vmem:[%s4] sm:$0x1]
  %v40 = vpack.c.bf16 %v30, %v29
  %v41 = vpack.c.bf16 %v32, %v31
  %v42 = vpack.c.bf16 %v34, %v33
  %v43 = vpack.c.bf16 %v36, %v35
  %v44 = vperm.slane %v39, 0
  %v47 = vunpack.c.l.b16 %v37
  %v48 = vunpack.c.l.b16 %v38
  %v49 = vpack.c.b16 %v48, %v47
  %vm51 = vcmask 130048
  %v53 = vsel %vm51, %v40, 0
  %v56 = vsel %vm51, %v41, 0
  %v59 = vsel %vm51, %v42, 0
  %v62 = vsel %vm51, %v43, 0
  %64 = vmatpush.bf16.msra.mxu0 0
  %65 = vmatpush.bf16.msra.mxu0 0
  %66 = vmatpush.bf16.msra.mxu0 0
  %67 = vmatpush.bf16.msra.mxu0 0
  %68 = vmatpush.bf16.msra.mxu0 0
  %69 = vmatpush.bf16.msra.mxu0 0
  %70 = vmatpush.bf16.msra.mxu0 0
  %71 = vmatpush.bf16.msra.mxu0 %v49
  %72 = vmatmul.bf16.gmra.mxu0 %v53
  %v73 = vpop.f32.mrf.mxu0
  %v74 = vadd.f32 %v44, %v73
  %v75 = vpop.f32.mrf.mxu0
  %v76 = vadd.f32 %v44, %v75
  %77 = vmatmul.bf16.gmra.mxu0 %v56
  %v78 = vpop.f32.mrf.mxu0
  %v79 = vadd.f32 %v44, %v78
  %v80 = vpop.f32.mrf.mxu0
  %v81 = vadd.f32 %v44, %v80
  %82 = vmatmul.bf16.gmra.mxu0 %v59
  %v83 = vpop.f32.mrf.mxu0
  %v84 = vadd.f32 %v44, %v83
  %v85 = vpop.f32.mrf.mxu0
  %v86 = vadd.f32 %v44, %v85
  %87 = vmatmul.bf16.gmra.mxu0 %v62
  %v88 = vpop.f32.mrf.mxu0
  %v89 = vadd.f32 %v44, %v88
  %v90 = vpop.f32.mrf.mxu0
  %v91 = vadd.f32 %v44, %v90
  %92 = vdwg.mxu0
  %v93 = vmax.f32 %v74, 0.0
  %v94 = vmax.f32 %v76, 0.0
  %v95 = vmax.f32 %v79, 0.0
  %v96 = vmax.f32 %v81, 0.0
  %v97 = vmax.f32 %v84, 0.0
  %v98 = vmax.f32 %v86, 0.0
  %v99 = vmax.f32 %v89, 0.0
  %v100 = vmax.f32 %v91, 0.0
  %v101 = vld [vmem:[%s3 + $0x8] sm:$0xf]
  %v102 = vld [vmem:[%s3 + $0xc] sm:$0xf]
  %v103 = vld [vmem:[%s3 + $0x10] sm:$0xf]
  %v104 = vld [vmem:[%s3 + $0x14] sm:$0xf]
  %v105 = vld [vmem:[%s4 + $0x1] sm:$0x1]
  %v106 = vpack.c.bf16 %v94, %v93
  %v107 = vpack.c.bf16 %v96, %v95
  %v108 = vpack.c.bf16 %v98, %v97
  %v109 = vpack.c.bf16 %v100, %v99
  %v110 = vperm.slane %v105, 0
  %v115 = vunpack.c.l.b16 %v101
  %v116 = vunpack.c.l.b16 %v102
  %v117 = vunpack.c.l.b16 %v103
  %v118 = vunpack.c.l.b16 %v104
  %v119 = vpack.c.b16 %v116, %v115
  %v120 = vpack.c.b16 %v118, %v117
  %vm123 = vcmask 261120
  %v125 = vsel %vm123, %v106, 0
  %v128 = vsel %vm123, %v107, 0
  %v131 = vsel %vm123, %v108, 0
  %v134 = vsel %vm123, %v109, 0
  %136 = vmatpush.bf16.msra.mxu0 0
  %137 = vmatpush.bf16.msra.mxu0 0
  %138 = vmatpush.bf16.msra.mxu0 0
  %139 = vmatpush.bf16.msra.mxu0 0
  %140 = vmatpush.bf16.msra.mxu0 0
  %141 = vmatpush.bf16.msra.mxu0 0
  %142 = vmatpush.bf16.msra.mxu0 %v120
  %143 = vmatpush.bf16.msra.mxu0 %v119
  %144 = vmatmul.bf16.gmra.mxu0 %v125
  %v145 = vpop.f32.mrf.mxu0
  %v146 = vadd.f32 %v110, %v145
  %v147 = vpop.f32.mrf.mxu0
  %v148 = vadd.f32 %v110, %v147
  %149 = vmatmul.bf16.gmra.mxu0 %v128
  %v150 = vpop.f32.mrf.mxu0
  %v151 = vadd.f32 %v110, %v150
  %v152 = vpop.f32.mrf.mxu0
  %v153 = vadd.f32 %v110, %v152
  %154 = vmatmul.bf16.gmra.mxu0 %v131
  %v155 = vpop.f32.mrf.mxu0
  %v156 = vadd.f32 %v110, %v155
  %v157 = vpop.f32.mrf.mxu0
  %v158 = vadd.f32 %v110, %v157
  %159 = vmatmul.bf16.gmra.mxu0 %v134
  %v160 = vpop.f32.mrf.mxu0
  %v161 = vadd.f32 %v110, %v160
  %v162 = vpop.f32.mrf.mxu0
  %v163 = vadd.f32 %v110, %v162
  %164 = vdwg.mxu0
  %v165 = vmax.f32 %v146, 0.0
  %v166 = vmax.f32 %v148, 0.0
  %v167 = vmax.f32 %v151, 0.0
  %v168 = vmax.f32 %v153, 0.0
  %v169 = vmax.f32 %v156, 0.0
  %v170 = vmax.f32 %v158, 0.0
  %v171 = vmax.f32 %v161, 0.0
  %v172 = vmax.f32 %v163, 0.0
  %v173 = vld [vmem:[%s3 + $0x18] sm:$0xf]
  %v174 = vld [vmem:[%s3 + $0x1c] sm:$0xf]
  %v175 = vld [vmem:[%s3 + $0x20] sm:$0xf]
  %v176 = vld [vmem:[%s3 + $0x24] sm:$0xf]
  %v177 = vld [vmem:[%s4 + $0x2] sm:$0x1]
  %v178 = vpack.c.bf16 %v166, %v165
  %v179 = vpack.c.bf16 %v168, %v167
  %v180 = vpack.c.bf16 %v170, %v169
  %v181 = vpack.c.bf16 %v172, %v171
  %v182 = vperm.slane %v177, 0
  %v187 = vunpack.c.l.b16 %v173
  %v188 = vunpack.c.l.b16 %v174
  %v189 = vunpack.c.l.b16 %v175
  %v190 = vunpack.c.l.b16 %v176
  %v191 = vpack.c.b16 %v188, %v187
  %v192 = vpack.c.b16 %v190, %v189
  %v196 = vsel %vm123, %v178, 0
  %v199 = vsel %vm123, %v179, 0
  %v202 = vsel %vm123, %v180, 0
  %v205 = vsel %vm123, %v181, 0
  %207 = vmatpush.bf16.msra.mxu0 0
  %208 = vmatpush.bf16.msra.mxu0 0
  %209 = vmatpush.bf16.msra.mxu0 0
  %210 = vmatpush.bf16.msra.mxu0 0
  %211 = vmatpush.bf16.msra.mxu0 0
  %212 = vmatpush.bf16.msra.mxu0 0
  %213 = vmatpush.bf16.msra.mxu0 %v192
  %214 = vmatpush.bf16.msra.mxu0 %v191
  %215 = vmatmul.bf16.gmra.mxu0 %v196
  %v216 = vpop.f32.mrf.mxu0
  %v217 = vadd.f32 %v182, %v216
  %v218 = vpop.f32.mrf.mxu0
  %v219 = vadd.f32 %v182, %v218
  %220 = vmatmul.bf16.gmra.mxu0 %v199
  %v221 = vpop.f32.mrf.mxu0
  %v222 = vadd.f32 %v182, %v221
  %v223 = vpop.f32.mrf.mxu0
  %v224 = vadd.f32 %v182, %v223
  %225 = vmatmul.bf16.gmra.mxu0 %v202
  %v226 = vpop.f32.mrf.mxu0
  %v227 = vadd.f32 %v182, %v226
  %v228 = vpop.f32.mrf.mxu0
  %v229 = vadd.f32 %v182, %v228
  %230 = vmatmul.bf16.gmra.mxu0 %v205
  %v231 = vpop.f32.mrf.mxu0
  %v232 = vadd.f32 %v182, %v231
  %v233 = vpop.f32.mrf.mxu0
  %v234 = vadd.f32 %v182, %v233
  %235 = vdwg.mxu0
  %v236 = vld [vmem:[%s4 + $0x3] sm:$0x1]
  %v237 = vld [vmem:[%s4 + $0x4] sm:$0x1]
  %v238 = vsel %vm123, %v217, 0.0
  %239 = vadd.xlane.f32.xlu0 %v238
  %v240 = vpop.xlane.xlu0 %239
  %v241 = vsel %vm123, %v219, 0.0
  %242 = vadd.xlane.f32.xlu0 %v241
  %v243 = vpop.xlane.xlu0 %242
  %v244 = vsel %vm123, %v222, 0.0
  %245 = vadd.xlane.f32.xlu0 %v244
  %v246 = vpop.xlane.xlu0 %245
  %v247 = vsel %vm123, %v224, 0.0
  %248 = vadd.xlane.f32.xlu0 %v247
  %v249 = vpop.xlane.xlu0 %248
  %v250 = vsel %vm123, %v227, 0.0
  %251 = vadd.xlane.f32.xlu0 %v250
  %v252 = vpop.xlane.xlu0 %251
  %v253 = vsel %vm123, %v229, 0.0
  %254 = vadd.xlane.f32.xlu0 %v253
  %v255 = vpop.xlane.xlu0 %254
  %v256 = vsel %vm123, %v232, 0.0
  %257 = vadd.xlane.f32.xlu0 %v256
  %v258 = vpop.xlane.xlu0 %257
  %v259 = vsel %vm123, %v234, 0.0
  %260 = vadd.xlane.f32.xlu0 %v259
  %v261 = vpop.xlane.xlu0 %260
  %v262 = vrcp.pop 32.0
  %v263 = vmul.f32 32.0, %v262
  %v264 = vsub.f32 1.0, %v263
  %v265 = vmul.f32 %v262, %v264
  %v266 = vadd.f32 %v262, %v265
  %vm267 = vweird.f32 %v262
  %v268 = vsel %vm267, %v262, %v266
  %v269 = vmul.f32 %v240, %v268
  %v270 = vmul.f32 %v243, %v268
  %v271 = vmul.f32 %v246, %v268
  %v272 = vmul.f32 %v249, %v268
  %v273 = vmul.f32 %v252, %v268
  %v274 = vmul.f32 %v255, %v268
  %v275 = vmul.f32 %v258, %v268
  %v276 = vmul.f32 %v261, %v268
  %v277 = vsub.f32 %v217, %v269
  %v278 = vsub.f32 %v219, %v270
  %v279 = vsub.f32 %v222, %v271
  %v280 = vsub.f32 %v224, %v272
  %v281 = vsub.f32 %v227, %v273
  %v282 = vsub.f32 %v229, %v274
  %v283 = vsub.f32 %v232, %v275
  %v284 = vsub.f32 %v234, %v276
  %v285 = vmul.f32 %v277, %v277
  %v286 = vmul.f32 %v278, %v278
  %v287 = vmul.f32 %v279, %v279
  %v288 = vmul.f32 %v280, %v280
  %v289 = vmul.f32 %v281, %v281
  %v290 = vmul.f32 %v282, %v282
  %v291 = vmul.f32 %v283, %v283
  %v292 = vmul.f32 %v284, %v284
  %v293 = vsel %vm123, %v285, 0.0
  %294 = vadd.xlane.f32.xlu0 %v293
  %v295 = vpop.xlane.xlu0 %294
  %v296 = vsel %vm123, %v286, 0.0
  %297 = vadd.xlane.f32.xlu0 %v296
  %v298 = vpop.xlane.xlu0 %297
  %v299 = vsel %vm123, %v287, 0.0
  %300 = vadd.xlane.f32.xlu0 %v299
  %v301 = vpop.xlane.xlu0 %300
  %v302 = vsel %vm123, %v288, 0.0
  %303 = vadd.xlane.f32.xlu0 %v302
  %v304 = vpop.xlane.xlu0 %303
  %v305 = vsel %vm123, %v289, 0.0
  %306 = vadd.xlane.f32.xlu0 %v305
  %v307 = vpop.xlane.xlu0 %306
  %v308 = vsel %vm123, %v290, 0.0
  %309 = vadd.xlane.f32.xlu0 %v308
  %v310 = vpop.xlane.xlu0 %309
  %v311 = vsel %vm123, %v291, 0.0
  %312 = vadd.xlane.f32.xlu0 %v311
  %v313 = vpop.xlane.xlu0 %312
  %v314 = vsel %vm123, %v292, 0.0
  %315 = vadd.xlane.f32.xlu0 %v314
  %v316 = vpop.xlane.xlu0 %315
  %v317 = vmul.f32 %v295, %v268
  %v318 = vmul.f32 %v298, %v268
  %v319 = vmul.f32 %v301, %v268
  %v320 = vmul.f32 %v304, %v268
  %v321 = vmul.f32 %v307, %v268
  %v322 = vmul.f32 %v310, %v268
  %v323 = vmul.f32 %v313, %v268
  %v324 = vmul.f32 %v316, %v268
  %v325 = vadd.f32 %v317, 1e-05
  %v326 = vadd.f32 %v318, 1e-05
  %v327 = vadd.f32 %v319, 1e-05
  %v328 = vadd.f32 %v320, 1e-05
  %v329 = vadd.f32 %v321, 1e-05
  %v330 = vadd.f32 %v322, 1e-05
  %v331 = vadd.f32 %v323, 1e-05
  %v332 = vadd.f32 %v324, 1e-05
  %v333 = vrsqrt.pop %v325
  %v334 = vmul.f32 %v333, %v325
  %v335 = vmul.f32 %v334, %v333
  %v336 = vmul.f32 0.5, %v335
  %v337 = vsub.f32 1.5, %v336
  %v338 = vmul.f32 %v333, %v337
  %vm339 = vweird.f32 %v325
  %vm340 = vweird.f32 %v333
  %vm341 = vmor %vm339, %vm340
  %v342 = vsel %vm341, %v333, %v338
  %v343 = vrsqrt.pop %v326
  %v344 = vmul.f32 %v343, %v326
  %v345 = vmul.f32 %v344, %v343
  %v346 = vmul.f32 0.5, %v345
  %v347 = vsub.f32 1.5, %v346
  %v348 = vmul.f32 %v343, %v347
  %vm349 = vweird.f32 %v326
  %vm350 = vweird.f32 %v343
  %vm351 = vmor %vm349, %vm350
  %v352 = vsel %vm351, %v343, %v348
  %v353 = vrsqrt.pop %v327
  %v354 = vmul.f32 %v353, %v327
  %v355 = vmul.f32 %v354, %v353
  %v356 = vmul.f32 0.5, %v355
  %v357 = vsub.f32 1.5, %v356
  %v358 = vmul.f32 %v353, %v357
  %vm359 = vweird.f32 %v327
  %vm360 = vweird.f32 %v353
  %vm361 = vmor %vm359, %vm360
  %v362 = vsel %vm361, %v353, %v358
  %v363 = vrsqrt.pop %v328
  %v364 = vmul.f32 %v363, %v328
  %v365 = vmul.f32 %v364, %v363
  %v366 = vmul.f32 0.5, %v365
  %v367 = vsub.f32 1.5, %v366
  %v368 = vmul.f32 %v363, %v367
  %vm369 = vweird.f32 %v328
  %vm370 = vweird.f32 %v363
  %vm371 = vmor %vm369, %vm370
  %v372 = vsel %vm371, %v363, %v368
  %v373 = vrsqrt.pop %v329
  %v374 = vmul.f32 %v373, %v329
  %v375 = vmul.f32 %v374, %v373
  %v376 = vmul.f32 0.5, %v375
  %v377 = vsub.f32 1.5, %v376
  %v378 = vmul.f32 %v373, %v377
  %vm379 = vweird.f32 %v329
  %vm380 = vweird.f32 %v373
  %vm381 = vmor %vm379, %vm380
  %v382 = vsel %vm381, %v373, %v378
  %v383 = vrsqrt.pop %v330
  %v384 = vmul.f32 %v383, %v330
  %v385 = vmul.f32 %v384, %v383
  %v386 = vmul.f32 0.5, %v385
  %v387 = vsub.f32 1.5, %v386
  %v388 = vmul.f32 %v383, %v387
  %vm389 = vweird.f32 %v330
  %vm390 = vweird.f32 %v383
  %vm391 = vmor %vm389, %vm390
  %v392 = vsel %vm391, %v383, %v388
  %v393 = vrsqrt.pop %v331
  %v394 = vmul.f32 %v393, %v331
  %v395 = vmul.f32 %v394, %v393
  %v396 = vmul.f32 0.5, %v395
  %v397 = vsub.f32 1.5, %v396
  %v398 = vmul.f32 %v393, %v397
  %vm399 = vweird.f32 %v331
  %vm400 = vweird.f32 %v393
  %vm401 = vmor %vm399, %vm400
  %v402 = vsel %vm401, %v393, %v398
  %v403 = vrsqrt.pop %v332
  %v404 = vmul.f32 %v403, %v332
  %v405 = vmul.f32 %v404, %v403
  %v406 = vmul.f32 0.5, %v405
  %v407 = vsub.f32 1.5, %v406
  %v408 = vmul.f32 %v403, %v407
  %vm409 = vweird.f32 %v332
  %vm410 = vweird.f32 %v403
  %vm411 = vmor %vm409, %vm410
  %v412 = vsel %vm411, %v403, %v408
  %v413 = vmul.f32 %v277, %v342
  %v414 = vmul.f32 %v278, %v352
  %v415 = vmul.f32 %v279, %v362
  %v416 = vmul.f32 %v280, %v372
  %v417 = vmul.f32 %v281, %v382
  %v418 = vmul.f32 %v282, %v392
  %v419 = vmul.f32 %v283, %v402
  %v420 = vmul.f32 %v284, %v412
  %v421 = vperm.slane %v236, 0
  %v422 = vmul.f32 %v413, %v421
  %v423 = vmul.f32 %v414, %v421
  %v424 = vmul.f32 %v415, %v421
  %v425 = vmul.f32 %v416, %v421
  %v426 = vmul.f32 %v417, %v421
  %v427 = vmul.f32 %v418, %v421
  %v428 = vmul.f32 %v419, %v421
  %v429 = vmul.f32 %v420, %v421
  %v430 = vperm.slane %v237, 0
  %v431 = vadd.f32 %v422, %v430
  %v432 = vadd.f32 %v423, %v430
  %v433 = vadd.f32 %v424, %v430
  %v434 = vadd.f32 %v425, %v430
  %v435 = vadd.f32 %v426, %v430
  %v436 = vadd.f32 %v427, %v430
  %v437 = vadd.f32 %v428, %v430
  %v438 = vadd.f32 %v429, %v430
  %vm439 = vcmask 523264
  %v441 = vsel %vm439, %v21, 0
  %v444 = vsel %vm439, %v22, 0
  %v447 = vsel %vm439, %v23, 0
  %v450 = vsel %vm439, %v24, 0
  %v453 = vsel %vm439, %v25, 0
  %v456 = vsel %vm439, %v26, 0
  %v459 = vsel %vm439, %v27, 0
  %v462 = vsel %vm439, %v28, 0
  %464 = vmatpush.msra.mxu0 0.0
  %465 = vmatpush.msra.mxu0 0.0
  %466 = vmatpush.msra.mxu0 0.0
  %467 = vmatpush.msra.mxu0 0.0
  %468 = vmatpush.msra.mxu0 0.0
  %469 = vmatpush.msra.mxu0 0.0
  %470 = vmatpush.msra.mxu0 0.0
  %471 = vmatpush.msra.mxu0 0.0
  %472 = vmatpush.msra.mxu0 %v438
  %473 = vmatpush.msra.mxu0 %v437
  %474 = vmatpush.msra.mxu0 %v436
  %475 = vmatpush.msra.mxu0 %v435
  %476 = vmatpush.msra.mxu0 %v434
  %477 = vmatpush.msra.mxu0 %v433
  %478 = vmatpush.msra.mxu0 %v432
  %479 = vmatpush.msra.mxu0 %v431
  %480 = vmatmul.f32.gmra.mxu0 %v441
  %v481 = vpop.f32.mrf.mxu0
  %v482 = vadd.f32 0.0, %v481
  %483 = vmatmul.f32.gmra.mxu0 %v444
  %v484 = vpop.f32.mrf.mxu0
  %v485 = vadd.f32 0.0, %v484
  %486 = vmatmul.f32.gmra.mxu0 %v447
  %v487 = vpop.f32.mrf.mxu0
  %v488 = vadd.f32 0.0, %v487
  %489 = vmatmul.f32.gmra.mxu0 %v450
  %v490 = vpop.f32.mrf.mxu0
  %v491 = vadd.f32 0.0, %v490
  %492 = vmatmul.f32.gmra.mxu0 %v453
  %v493 = vpop.f32.mrf.mxu0
  %v494 = vadd.f32 0.0, %v493
  %495 = vmatmul.f32.gmra.mxu0 %v456
  %v496 = vpop.f32.mrf.mxu0
  %v497 = vadd.f32 0.0, %v496
  %498 = vmatmul.f32.gmra.mxu0 %v459
  %v499 = vpop.f32.mrf.mxu0
  %v500 = vadd.f32 0.0, %v499
  %501 = vmatmul.f32.gmra.mxu0 %v462
  %v502 = vpop.f32.mrf.mxu0
  %v503 = vadd.f32 0.0, %v502
  %504 = vdwg.mxu0
  %513 = vrot.lane.b32.xlu0 %v482, 32
  %v514 = vpop.permute.xlu0 %513
  %515 = vrot.lane.b32.xlu0 %v485, 32
  %v516 = vpop.permute.xlu0 %515
  %517 = vrot.lane.b32.xlu0 %v488, 32
  %v518 = vpop.permute.xlu0 %517
  %519 = vrot.lane.b32.xlu0 %v491, 32
  %v520 = vpop.permute.xlu0 %519
  %521 = vrot.lane.b32.xlu0 %v494, 32
  %v522 = vpop.permute.xlu0 %521
  %523 = vrot.lane.b32.xlu0 %v497, 32
  %v524 = vpop.permute.xlu0 %523
  %525 = vrot.lane.b32.xlu0 %v500, 32
  %v526 = vpop.permute.xlu0 %525
  %527 = vrot.lane.b32.xlu0 %v503, 32
  %v528 = vpop.permute.xlu0 %527
  %v537 = vsel %vm123, %v431, %v514
  %v538 = vsel %vm123, %v432, %v516
  %v539 = vsel %vm123, %v433, %v518
  %v540 = vsel %vm123, %v434, %v520
  %v541 = vsel %vm123, %v435, %v522
  %v542 = vsel %vm123, %v436, %v524
  %v543 = vsel %vm123, %v437, %v526
  %v544 = vsel %vm123, %v438, %v528
  %v545 = vld [vmem:[%s3 + $0xa0] sm:$0xf]
  %v546 = vld [vmem:[%s3 + $0xa4] sm:$0xf]
  %v547 = vld [vmem:[%s3 + $0xa8] sm:$0xf]
  %v548 = vld [vmem:[%s3 + $0xac] sm:$0xf]
  %v549 = vld [vmem:[%s3 + $0xb0] sm:$0xf]
  %v550 = vld [vmem:[%s3 + $0xb4] sm:$0xf]
  %v551 = vld [vmem:[%s3 + $0xb8] sm:$0xf]
  %v552 = vld [vmem:[%s3 + $0xbc] sm:$0xf]
  %v553 = vld [vmem:[%s4 + $0xf] sm:$0x1]
  %v554 = vpack.c.bf16 %v538, %v537
  %v555 = vpack.c.bf16 %v540, %v539
  %v556 = vpack.c.bf16 %v542, %v541
  %v557 = vpack.c.bf16 %v544, %v543
  %v558 = vperm.slane %v553, 0
  %v567 = vunpack.c.l.b16 %v545
  %v568 = vunpack.c.l.b16 %v546
  %v569 = vunpack.c.l.b16 %v547
  %v570 = vunpack.c.l.b16 %v548
  %v571 = vunpack.c.l.b16 %v549
  %v572 = vunpack.c.l.b16 %v550
  %v573 = vunpack.c.l.b16 %v551
  %v574 = vunpack.c.l.b16 %v552
  %v575 = vpack.c.b16 %v568, %v567
  %v576 = vpack.c.b16 %v570, %v569
  %v577 = vpack.c.b16 %v572, %v571
  %v578 = vpack.c.b16 %v574, %v573
  %v584 = vsel %vm439, %v554, 0
  %v587 = vsel %vm439, %v555, 0
  %v590 = vsel %vm439, %v556, 0
  %v593 = vsel %vm439, %v557, 0
  %595 = vmatpush.bf16.msra.mxu0 0
  %596 = vmatpush.bf16.msra.mxu0 0
  %597 = vmatpush.bf16.msra.mxu0 0
  %598 = vmatpush.bf16.msra.mxu0 0
  %599 = vmatpush.bf16.msra.mxu0 %v578
  %600 = vmatpush.bf16.msra.mxu0 %v577
  %601 = vmatpush.bf16.msra.mxu0 %v576
  %602 = vmatpush.bf16.msra.mxu0 %v575
  %603 = vmatmul.bf16.gmra.mxu0 %v584
  %v604 = vpop.f32.mrf.mxu0
  %v605 = vadd.f32 %v558, %v604
  %v606 = vpop.f32.mrf.mxu0
  %v607 = vadd.f32 %v558, %v606
  %608 = vmatmul.bf16.gmra.mxu0 %v587
  %v609 = vpop.f32.mrf.mxu0
  %v610 = vadd.f32 %v558, %v609
  %v611 = vpop.f32.mrf.mxu0
  %v612 = vadd.f32 %v558, %v611
  %613 = vmatmul.bf16.gmra.mxu0 %v590
  %v614 = vpop.f32.mrf.mxu0
  %v615 = vadd.f32 %v558, %v614
  %v616 = vpop.f32.mrf.mxu0
  %v617 = vadd.f32 %v558, %v616
  %618 = vmatmul.bf16.gmra.mxu0 %v593
  %v619 = vpop.f32.mrf.mxu0
  %v620 = vadd.f32 %v558, %v619
  %v621 = vpop.f32.mrf.mxu0
  %v622 = vadd.f32 %v558, %v621
  %623 = vdwg.mxu0
  %v624 = vmax.f32 %v605, 0.0
  %v625 = vmax.f32 %v607, 0.0
  %v626 = vmax.f32 %v610, 0.0
  %v627 = vmax.f32 %v612, 0.0
  %v628 = vmax.f32 %v615, 0.0
  %v629 = vmax.f32 %v617, 0.0
  %v630 = vmax.f32 %v620, 0.0
  %v631 = vmax.f32 %v622, 0.0
  %v632 = vld [vmem:[%s3 + $0xc0] sm:$0xf]
  %v633 = vld [vmem:[%s3 + $0xc4] sm:$0xf]
  %v634 = vld [vmem:[%s3 + $0xc8] sm:$0xf]
  %v635 = vld [vmem:[%s3 + $0xcc] sm:$0xf]
  %v636 = vld [vmem:[%s4 + $0x10] sm:$0x1]
  %v637 = vpack.c.bf16 %v625, %v624
  %v638 = vpack.c.bf16 %v627, %v626
  %v639 = vpack.c.bf16 %v629, %v628
  %v640 = vpack.c.bf16 %v631, %v630
  %v641 = vperm.slane %v636, 0
  %v646 = vunpack.c.l.b16 %v632
  %v647 = vunpack.c.l.b16 %v633
  %v648 = vunpack.c.l.b16 %v634
  %v649 = vunpack.c.l.b16 %v635
  %v650 = vpack.c.b16 %v647, %v646
  %v651 = vpack.c.b16 %v649, %v648
  %v655 = vsel %vm123, %v637, 0
  %v658 = vsel %vm123, %v638, 0
  %v661 = vsel %vm123, %v639, 0
  %v664 = vsel %vm123, %v640, 0
  %666 = vmatpush.bf16.msra.mxu0 0
  %667 = vmatpush.bf16.msra.mxu0 0
  %668 = vmatpush.bf16.msra.mxu0 0
  %669 = vmatpush.bf16.msra.mxu0 0
  %670 = vmatpush.bf16.msra.mxu0 0
  %671 = vmatpush.bf16.msra.mxu0 0
  %672 = vmatpush.bf16.msra.mxu0 %v651
  %673 = vmatpush.bf16.msra.mxu0 %v650
  %674 = vmatmul.bf16.gmra.mxu0 %v655
  %v675 = vpop.f32.mrf.mxu0
  %v676 = vadd.f32 %v641, %v675
  %v677 = vpop.f32.mrf.mxu0
  %v678 = vadd.f32 %v641, %v677
  %679 = vmatmul.bf16.gmra.mxu0 %v658
  %v680 = vpop.f32.mrf.mxu0
  %v681 = vadd.f32 %v641, %v680
  %v682 = vpop.f32.mrf.mxu0
  %v683 = vadd.f32 %v641, %v682
  %684 = vmatmul.bf16.gmra.mxu0 %v661
  %v685 = vpop.f32.mrf.mxu0
  %v686 = vadd.f32 %v641, %v685
  %v687 = vpop.f32.mrf.mxu0
  %v688 = vadd.f32 %v641, %v687
  %689 = vmatmul.bf16.gmra.mxu0 %v664
  %v690 = vpop.f32.mrf.mxu0
  %v691 = vadd.f32 %v641, %v690
  %v692 = vpop.f32.mrf.mxu0
  %v693 = vadd.f32 %v641, %v692
  %694 = vdwg.mxu0
  %v695 = vmax.f32 %v676, 0.0
  %v696 = vmax.f32 %v678, 0.0
  %v697 = vmax.f32 %v681, 0.0
  %v698 = vmax.f32 %v683, 0.0
  %v699 = vmax.f32 %v686, 0.0
  %v700 = vmax.f32 %v688, 0.0
  %v701 = vmax.f32 %v691, 0.0
  %v702 = vmax.f32 %v693, 0.0
  %v703 = vld [vmem:[%s3 + $0xd0] sm:$0xf]
  %v704 = vld [vmem:[%s3 + $0xd4] sm:$0xf]
  %v705 = vld [vmem:[%s3 + $0xd8] sm:$0xf]
  %v706 = vld [vmem:[%s3 + $0xdc] sm:$0xf]
  %v707 = vld [vmem:[%s4 + $0x11] sm:$0x1]
  %v708 = vpack.c.bf16 %v696, %v695
  %v709 = vpack.c.bf16 %v698, %v697
  %v710 = vpack.c.bf16 %v700, %v699
  %v711 = vpack.c.bf16 %v702, %v701
  %v712 = vperm.slane %v707, 0
  %v717 = vunpack.c.l.b16 %v703
  %v718 = vunpack.c.l.b16 %v704
  %v719 = vunpack.c.l.b16 %v705
  %v720 = vunpack.c.l.b16 %v706
  %v721 = vpack.c.b16 %v718, %v717
  %v722 = vpack.c.b16 %v720, %v719
  %v726 = vsel %vm123, %v708, 0
  %v729 = vsel %vm123, %v709, 0
  %v732 = vsel %vm123, %v710, 0
  %v735 = vsel %vm123, %v711, 0
  %737 = vmatpush.bf16.msra.mxu0 0
  %738 = vmatpush.bf16.msra.mxu0 0
  %739 = vmatpush.bf16.msra.mxu0 0
  %740 = vmatpush.bf16.msra.mxu0 0
  %741 = vmatpush.bf16.msra.mxu0 0
  %742 = vmatpush.bf16.msra.mxu0 0
  %743 = vmatpush.bf16.msra.mxu0 %v722
  %744 = vmatpush.bf16.msra.mxu0 %v721
  %745 = vmatmul.bf16.gmra.mxu0 %v726
  %v746 = vpop.f32.mrf.mxu0
  %v747 = vadd.f32 %v712, %v746
  %v748 = vpop.f32.mrf.mxu0
  %v749 = vadd.f32 %v712, %v748
  %750 = vmatmul.bf16.gmra.mxu0 %v729
  %v751 = vpop.f32.mrf.mxu0
  %v752 = vadd.f32 %v712, %v751
  %v753 = vpop.f32.mrf.mxu0
  %v754 = vadd.f32 %v712, %v753
  %755 = vmatmul.bf16.gmra.mxu0 %v732
  %v756 = vpop.f32.mrf.mxu0
  %v757 = vadd.f32 %v712, %v756
  %v758 = vpop.f32.mrf.mxu0
  %v759 = vadd.f32 %v712, %v758
  %760 = vmatmul.bf16.gmra.mxu0 %v735
  %v761 = vpop.f32.mrf.mxu0
  %v762 = vadd.f32 %v712, %v761
  %v763 = vpop.f32.mrf.mxu0
  %v764 = vadd.f32 %v712, %v763
  %765 = vdwg.mxu0
  %v766 = vld [vmem:[%s4 + $0x12] sm:$0x1]
  %v767 = vld [vmem:[%s4 + $0x13] sm:$0x1]
  %v768 = vsel %vm123, %v747, 0.0
  %769 = vadd.xlane.f32.xlu0 %v768
  %v770 = vpop.xlane.xlu0 %769
  %v771 = vsel %vm123, %v749, 0.0
  %772 = vadd.xlane.f32.xlu0 %v771
  %v773 = vpop.xlane.xlu0 %772
  %v774 = vsel %vm123, %v752, 0.0
  %775 = vadd.xlane.f32.xlu0 %v774
  %v776 = vpop.xlane.xlu0 %775
  %v777 = vsel %vm123, %v754, 0.0
  %778 = vadd.xlane.f32.xlu0 %v777
  %v779 = vpop.xlane.xlu0 %778
  %v780 = vsel %vm123, %v757, 0.0
  %781 = vadd.xlane.f32.xlu0 %v780
  %v782 = vpop.xlane.xlu0 %781
  %v783 = vsel %vm123, %v759, 0.0
  %784 = vadd.xlane.f32.xlu0 %v783
  %v785 = vpop.xlane.xlu0 %784
  %v786 = vsel %vm123, %v762, 0.0
  %787 = vadd.xlane.f32.xlu0 %v786
  %v788 = vpop.xlane.xlu0 %787
  %v789 = vsel %vm123, %v764, 0.0
  %790 = vadd.xlane.f32.xlu0 %v789
  %v791 = vpop.xlane.xlu0 %790
  %v792 = vmul.f32 %v770, %v268
  %v793 = vmul.f32 %v773, %v268
  %v794 = vmul.f32 %v776, %v268
  %v795 = vmul.f32 %v779, %v268
  %v796 = vmul.f32 %v782, %v268
  %v797 = vmul.f32 %v785, %v268
  %v798 = vmul.f32 %v788, %v268
  %v799 = vmul.f32 %v791, %v268
  %v800 = vsub.f32 %v747, %v792
  %v801 = vsub.f32 %v749, %v793
  %v802 = vsub.f32 %v752, %v794
  %v803 = vsub.f32 %v754, %v795
  %v804 = vsub.f32 %v757, %v796
  %v805 = vsub.f32 %v759, %v797
  %v806 = vsub.f32 %v762, %v798
  %v807 = vsub.f32 %v764, %v799
  %v808 = vmul.f32 %v800, %v800
  %v809 = vmul.f32 %v801, %v801
  %v810 = vmul.f32 %v802, %v802
  %v811 = vmul.f32 %v803, %v803
  %v812 = vmul.f32 %v804, %v804
  %v813 = vmul.f32 %v805, %v805
  %v814 = vmul.f32 %v806, %v806
  %v815 = vmul.f32 %v807, %v807
  %v816 = vsel %vm123, %v808, 0.0
  %817 = vadd.xlane.f32.xlu0 %v816
  %v818 = vpop.xlane.xlu0 %817
  %v819 = vsel %vm123, %v809, 0.0
  %820 = vadd.xlane.f32.xlu0 %v819
  %v821 = vpop.xlane.xlu0 %820
  %v822 = vsel %vm123, %v810, 0.0
  %823 = vadd.xlane.f32.xlu0 %v822
  %v824 = vpop.xlane.xlu0 %823
  %v825 = vsel %vm123, %v811, 0.0
  %826 = vadd.xlane.f32.xlu0 %v825
  %v827 = vpop.xlane.xlu0 %826
  %v828 = vsel %vm123, %v812, 0.0
  %829 = vadd.xlane.f32.xlu0 %v828
  %v830 = vpop.xlane.xlu0 %829
  %v831 = vsel %vm123, %v813, 0.0
  %832 = vadd.xlane.f32.xlu0 %v831
  %v833 = vpop.xlane.xlu0 %832
  %v834 = vsel %vm123, %v814, 0.0
  %835 = vadd.xlane.f32.xlu0 %v834
  %v836 = vpop.xlane.xlu0 %835
  %v837 = vsel %vm123, %v815, 0.0
  %838 = vadd.xlane.f32.xlu0 %v837
  %v839 = vpop.xlane.xlu0 %838
  %v840 = vmul.f32 %v818, %v268
  %v841 = vmul.f32 %v821, %v268
  %v842 = vmul.f32 %v824, %v268
  %v843 = vmul.f32 %v827, %v268
  %v844 = vmul.f32 %v830, %v268
  %v845 = vmul.f32 %v833, %v268
  %v846 = vmul.f32 %v836, %v268
  %v847 = vmul.f32 %v839, %v268
  %v848 = vadd.f32 %v840, 1e-05
  %v849 = vadd.f32 %v841, 1e-05
  %v850 = vadd.f32 %v842, 1e-05
  %v851 = vadd.f32 %v843, 1e-05
  %v852 = vadd.f32 %v844, 1e-05
  %v853 = vadd.f32 %v845, 1e-05
  %v854 = vadd.f32 %v846, 1e-05
  %v855 = vadd.f32 %v847, 1e-05
  %v856 = vrsqrt.pop %v848
  %v857 = vmul.f32 %v856, %v848
  %v858 = vmul.f32 %v857, %v856
  %v859 = vmul.f32 0.5, %v858
  %v860 = vsub.f32 1.5, %v859
  %v861 = vmul.f32 %v856, %v860
  %vm862 = vweird.f32 %v848
  %vm863 = vweird.f32 %v856
  %vm864 = vmor %vm862, %vm863
  %v865 = vsel %vm864, %v856, %v861
  %v866 = vrsqrt.pop %v849
  %v867 = vmul.f32 %v866, %v849
  %v868 = vmul.f32 %v867, %v866
  %v869 = vmul.f32 0.5, %v868
  %v870 = vsub.f32 1.5, %v869
  %v871 = vmul.f32 %v866, %v870
  %vm872 = vweird.f32 %v849
  %vm873 = vweird.f32 %v866
  %vm874 = vmor %vm872, %vm873
  %v875 = vsel %vm874, %v866, %v871
  %v876 = vrsqrt.pop %v850
  %v877 = vmul.f32 %v876, %v850
  %v878 = vmul.f32 %v877, %v876
  %v879 = vmul.f32 0.5, %v878
  %v880 = vsub.f32 1.5, %v879
  %v881 = vmul.f32 %v876, %v880
  %vm882 = vweird.f32 %v850
  %vm883 = vweird.f32 %v876
  %vm884 = vmor %vm882, %vm883
  %v885 = vsel %vm884, %v876, %v881
  %v886 = vrsqrt.pop %v851
  %v887 = vmul.f32 %v886, %v851
  %v888 = vmul.f32 %v887, %v886
  %v889 = vmul.f32 0.5, %v888
  %v890 = vsub.f32 1.5, %v889
  %v891 = vmul.f32 %v886, %v890
  %vm892 = vweird.f32 %v851
  %vm893 = vweird.f32 %v886
  %vm894 = vmor %vm892, %vm893
  %v895 = vsel %vm894, %v886, %v891
  %v896 = vrsqrt.pop %v852
  %v897 = vmul.f32 %v896, %v852
  %v898 = vmul.f32 %v897, %v896
  %v899 = vmul.f32 0.5, %v898
  %v900 = vsub.f32 1.5, %v899
  %v901 = vmul.f32 %v896, %v900
  %vm902 = vweird.f32 %v852
  %vm903 = vweird.f32 %v896
  %vm904 = vmor %vm902, %vm903
  %v905 = vsel %vm904, %v896, %v901
  %v906 = vrsqrt.pop %v853
  %v907 = vmul.f32 %v906, %v853
  %v908 = vmul.f32 %v907, %v906
  %v909 = vmul.f32 0.5, %v908
  %v910 = vsub.f32 1.5, %v909
  %v911 = vmul.f32 %v906, %v910
  %vm912 = vweird.f32 %v853
  %vm913 = vweird.f32 %v906
  %vm914 = vmor %vm912, %vm913
  %v915 = vsel %vm914, %v906, %v911
  %v916 = vrsqrt.pop %v854
  %v917 = vmul.f32 %v916, %v854
  %v918 = vmul.f32 %v917, %v916
  %v919 = vmul.f32 0.5, %v918
  %v920 = vsub.f32 1.5, %v919
  %v921 = vmul.f32 %v916, %v920
  %vm922 = vweird.f32 %v854
  %vm923 = vweird.f32 %v916
  %vm924 = vmor %vm922, %vm923
  %v925 = vsel %vm924, %v916, %v921
  %v926 = vrsqrt.pop %v855
  %v927 = vmul.f32 %v926, %v855
  %v928 = vmul.f32 %v927, %v926
  %v929 = vmul.f32 0.5, %v928
  %v930 = vsub.f32 1.5, %v929
  %v931 = vmul.f32 %v926, %v930
  %vm932 = vweird.f32 %v855
  %vm933 = vweird.f32 %v926
  %vm934 = vmor %vm932, %vm933
  %v935 = vsel %vm934, %v926, %v931
  %v936 = vmul.f32 %v800, %v865
  %v937 = vmul.f32 %v801, %v875
  %v938 = vmul.f32 %v802, %v885
  %v939 = vmul.f32 %v803, %v895
  %v940 = vmul.f32 %v804, %v905
  %v941 = vmul.f32 %v805, %v915
  %v942 = vmul.f32 %v806, %v925
  %v943 = vmul.f32 %v807, %v935
  %v944 = vperm.slane %v766, 0
  %v945 = vmul.f32 %v936, %v944
  %v946 = vmul.f32 %v937, %v944
  %v947 = vmul.f32 %v938, %v944
  %v948 = vmul.f32 %v939, %v944
  %v949 = vmul.f32 %v940, %v944
  %v950 = vmul.f32 %v941, %v944
  %v951 = vmul.f32 %v942, %v944
  %v952 = vmul.f32 %v943, %v944
  %v953 = vperm.slane %v767, 0
  %v954 = vadd.f32 %v945, %v953
  %v955 = vadd.f32 %v946, %v953
  %v956 = vadd.f32 %v947, %v953
  %v957 = vadd.f32 %v948, %v953
  %v958 = vadd.f32 %v949, %v953
  %v959 = vadd.f32 %v950, %v953
  %v960 = vadd.f32 %v951, %v953
  %v961 = vadd.f32 %v952, %v953
  %v962 = vadd.f32 %v431, %v954
  %v963 = vadd.f32 %v432, %v955
  %v964 = vadd.f32 %v433, %v956
  %v965 = vadd.f32 %v434, %v957
  %v966 = vadd.f32 %v435, %v958
  %v967 = vadd.f32 %v436, %v959
  %v968 = vadd.f32 %v437, %v960
  %v969 = vadd.f32 %v438, %v961
  %970 = vmatpush.msra.mxu0 0.0
  %971 = vmatpush.msra.mxu0 0.0
  %972 = vmatpush.msra.mxu0 0.0
  %973 = vmatpush.msra.mxu0 0.0
  %974 = vmatpush.msra.mxu0 0.0
  %975 = vmatpush.msra.mxu0 0.0
  %976 = vmatpush.msra.mxu0 0.0
  %977 = vmatpush.msra.mxu0 0.0
  %978 = vmatpush.msra.mxu0 %v969
  %979 = vmatpush.msra.mxu0 %v968
  %980 = vmatpush.msra.mxu0 %v967
  %981 = vmatpush.msra.mxu0 %v966
  %982 = vmatpush.msra.mxu0 %v965
  %983 = vmatpush.msra.mxu0 %v964
  %984 = vmatpush.msra.mxu0 %v963
  %985 = vmatpush.msra.mxu0 %v962
  %986 = vmatmul.f32.gmra.mxu0 %v441
  %v987 = vpop.f32.mrf.mxu0
  %v988 = vadd.f32 0.0, %v987
  %989 = vmatmul.f32.gmra.mxu0 %v444
  %v990 = vpop.f32.mrf.mxu0
  %v991 = vadd.f32 0.0, %v990
  %992 = vmatmul.f32.gmra.mxu0 %v447
  %v993 = vpop.f32.mrf.mxu0
  %v994 = vadd.f32 0.0, %v993
  %995 = vmatmul.f32.gmra.mxu0 %v450
  %v996 = vpop.f32.mrf.mxu0
  %v997 = vadd.f32 0.0, %v996
  %998 = vmatmul.f32.gmra.mxu0 %v453
  %v999 = vpop.f32.mrf.mxu0
  %v1000 = vadd.f32 0.0, %v999
  %1001 = vmatmul.f32.gmra.mxu0 %v456
  %v1002 = vpop.f32.mrf.mxu0
  %v1003 = vadd.f32 0.0, %v1002
  %1004 = vmatmul.f32.gmra.mxu0 %v459
  %v1005 = vpop.f32.mrf.mxu0
  %v1006 = vadd.f32 0.0, %v1005
  %1007 = vmatmul.f32.gmra.mxu0 %v462
  %v1008 = vpop.f32.mrf.mxu0
  %v1009 = vadd.f32 0.0, %v1008
  %1010 = vdwg.mxu0
  %1019 = vrot.lane.b32.xlu0 %v988, 32
  %v1020 = vpop.permute.xlu0 %1019
  %1021 = vrot.lane.b32.xlu0 %v991, 32
  %v1022 = vpop.permute.xlu0 %1021
  %1023 = vrot.lane.b32.xlu0 %v994, 32
  %v1024 = vpop.permute.xlu0 %1023
  %1025 = vrot.lane.b32.xlu0 %v997, 32
  %v1026 = vpop.permute.xlu0 %1025
  %1027 = vrot.lane.b32.xlu0 %v1000, 32
  %v1028 = vpop.permute.xlu0 %1027
  %1029 = vrot.lane.b32.xlu0 %v1003, 32
  %v1030 = vpop.permute.xlu0 %1029
  %1031 = vrot.lane.b32.xlu0 %v1006, 32
  %v1032 = vpop.permute.xlu0 %1031
  %1033 = vrot.lane.b32.xlu0 %v1009, 32
  %v1034 = vpop.permute.xlu0 %1033
  %v1043 = vsel %vm123, %v962, %v1020
  %v1044 = vsel %vm123, %v963, %v1022
  %v1045 = vsel %vm123, %v964, %v1024
  %v1046 = vsel %vm123, %v965, %v1026
  %v1047 = vsel %vm123, %v966, %v1028
  %v1048 = vsel %vm123, %v967, %v1030
  %v1049 = vsel %vm123, %v968, %v1032
  %v1050 = vsel %vm123, %v969, %v1034
  %v1051 = vld [vmem:[%s3 + $0x130] sm:$0xf]
  %v1052 = vld [vmem:[%s3 + $0x134] sm:$0xf]
  %v1053 = vld [vmem:[%s3 + $0x138] sm:$0xf]
  %v1054 = vld [vmem:[%s3 + $0x13c] sm:$0xf]
  %v1055 = vld [vmem:[%s3 + $0x140] sm:$0xf]
  %v1056 = vld [vmem:[%s3 + $0x144] sm:$0xf]
  %v1057 = vld [vmem:[%s3 + $0x148] sm:$0xf]
  %v1058 = vld [vmem:[%s3 + $0x14c] sm:$0xf]
  %v1059 = vld [vmem:[%s4 + $0x19] sm:$0x1]
  %v1060 = vpack.c.bf16 %v1044, %v1043
  %v1061 = vpack.c.bf16 %v1046, %v1045
  %v1062 = vpack.c.bf16 %v1048, %v1047
  %v1063 = vpack.c.bf16 %v1050, %v1049
  %v1064 = vperm.slane %v1059, 0
  %v1073 = vunpack.c.l.b16 %v1051
  %v1074 = vunpack.c.l.b16 %v1052
  %v1075 = vunpack.c.l.b16 %v1053
  %v1076 = vunpack.c.l.b16 %v1054
  %v1077 = vunpack.c.l.b16 %v1055
  %v1078 = vunpack.c.l.b16 %v1056
  %v1079 = vunpack.c.l.b16 %v1057
  %v1080 = vunpack.c.l.b16 %v1058
  %v1081 = vpack.c.b16 %v1074, %v1073
  %v1082 = vpack.c.b16 %v1076, %v1075
  %v1083 = vpack.c.b16 %v1078, %v1077
  %v1084 = vpack.c.b16 %v1080, %v1079
  %v1090 = vsel %vm439, %v1060, 0
  %v1093 = vsel %vm439, %v1061, 0
  %v1096 = vsel %vm439, %v1062, 0
  %v1099 = vsel %vm439, %v1063, 0
  %1101 = vmatpush.bf16.msra.mxu0 0
  %1102 = vmatpush.bf16.msra.mxu0 0
  %1103 = vmatpush.bf16.msra.mxu0 0
  %1104 = vmatpush.bf16.msra.mxu0 0
  %1105 = vmatpush.bf16.msra.mxu0 %v1084
  %1106 = vmatpush.bf16.msra.mxu0 %v1083
  %1107 = vmatpush.bf16.msra.mxu0 %v1082
  %1108 = vmatpush.bf16.msra.mxu0 %v1081
  %1109 = vmatmul.bf16.gmra.mxu0 %v1090
  %v1110 = vpop.f32.mrf.mxu0
  %v1111 = vadd.f32 %v1064, %v1110
  %v1112 = vpop.f32.mrf.mxu0
  %v1113 = vadd.f32 %v1064, %v1112
  %1114 = vmatmul.bf16.gmra.mxu0 %v1093
  %v1115 = vpop.f32.mrf.mxu0
  %v1116 = vadd.f32 %v1064, %v1115
  %v1117 = vpop.f32.mrf.mxu0
  %v1118 = vadd.f32 %v1064, %v1117
  %1119 = vmatmul.bf16.gmra.mxu0 %v1096
  %v1120 = vpop.f32.mrf.mxu0
  %v1121 = vadd.f32 %v1064, %v1120
  %v1122 = vpop.f32.mrf.mxu0
  %v1123 = vadd.f32 %v1064, %v1122
  %1124 = vmatmul.bf16.gmra.mxu0 %v1099
  %v1125 = vpop.f32.mrf.mxu0
  %v1126 = vadd.f32 %v1064, %v1125
  %v1127 = vpop.f32.mrf.mxu0
  %v1128 = vadd.f32 %v1064, %v1127
  %1129 = vdwg.mxu0
  %v1130 = vmax.f32 %v1111, 0.0
  %v1131 = vmax.f32 %v1113, 0.0
  %v1132 = vmax.f32 %v1116, 0.0
  %v1133 = vmax.f32 %v1118, 0.0
  %v1134 = vmax.f32 %v1121, 0.0
  %v1135 = vmax.f32 %v1123, 0.0
  %v1136 = vmax.f32 %v1126, 0.0
  %v1137 = vmax.f32 %v1128, 0.0
  %v1138 = vld [vmem:[%s3 + $0x150] sm:$0xf]
  %v1139 = vld [vmem:[%s3 + $0x154] sm:$0xf]
  %v1140 = vld [vmem:[%s3 + $0x158] sm:$0xf]
  %v1141 = vld [vmem:[%s3 + $0x15c] sm:$0xf]
  %v1142 = vld [vmem:[%s4 + $0x1a] sm:$0x1]
  %v1143 = vpack.c.bf16 %v1131, %v1130
  %v1144 = vpack.c.bf16 %v1133, %v1132
  %v1145 = vpack.c.bf16 %v1135, %v1134
  %v1146 = vpack.c.bf16 %v1137, %v1136
  %v1147 = vperm.slane %v1142, 0
  %v1152 = vunpack.c.l.b16 %v1138
  %v1153 = vunpack.c.l.b16 %v1139
  %v1154 = vunpack.c.l.b16 %v1140
  %v1155 = vunpack.c.l.b16 %v1141
  %v1156 = vpack.c.b16 %v1153, %v1152
  %v1157 = vpack.c.b16 %v1155, %v1154
  %v1161 = vsel %vm123, %v1143, 0
  %v1164 = vsel %vm123, %v1144, 0
  %v1167 = vsel %vm123, %v1145, 0
  %v1170 = vsel %vm123, %v1146, 0
  %1172 = vmatpush.bf16.msra.mxu0 0
  %1173 = vmatpush.bf16.msra.mxu0 0
  %1174 = vmatpush.bf16.msra.mxu0 0
  %1175 = vmatpush.bf16.msra.mxu0 0
  %1176 = vmatpush.bf16.msra.mxu0 0
  %1177 = vmatpush.bf16.msra.mxu0 0
  %1178 = vmatpush.bf16.msra.mxu0 %v1157
  %1179 = vmatpush.bf16.msra.mxu0 %v1156
  %1180 = vmatmul.bf16.gmra.mxu0 %v1161
  %v1181 = vpop.f32.mrf.mxu0
  %v1182 = vadd.f32 %v1147, %v1181
  %v1183 = vpop.f32.mrf.mxu0
  %v1184 = vadd.f32 %v1147, %v1183
  %1185 = vmatmul.bf16.gmra.mxu0 %v1164
  %v1186 = vpop.f32.mrf.mxu0
  %v1187 = vadd.f32 %v1147, %v1186
  %v1188 = vpop.f32.mrf.mxu0
  %v1189 = vadd.f32 %v1147, %v1188
  %1190 = vmatmul.bf16.gmra.mxu0 %v1167
  %v1191 = vpop.f32.mrf.mxu0
  %v1192 = vadd.f32 %v1147, %v1191
  %v1193 = vpop.f32.mrf.mxu0
  %v1194 = vadd.f32 %v1147, %v1193
  %1195 = vmatmul.bf16.gmra.mxu0 %v1170
  %v1196 = vpop.f32.mrf.mxu0
  %v1197 = vadd.f32 %v1147, %v1196
  %v1198 = vpop.f32.mrf.mxu0
  %v1199 = vadd.f32 %v1147, %v1198
  %1200 = vdwg.mxu0
  %v1201 = vmax.f32 %v1182, 0.0
  %v1202 = vmax.f32 %v1184, 0.0
  %v1203 = vmax.f32 %v1187, 0.0
  %v1204 = vmax.f32 %v1189, 0.0
  %v1205 = vmax.f32 %v1192, 0.0
  %v1206 = vmax.f32 %v1194, 0.0
  %v1207 = vmax.f32 %v1197, 0.0
  %v1208 = vmax.f32 %v1199, 0.0
  %v1209 = vld [vmem:[%s3 + $0x160] sm:$0xf]
  %v1210 = vld [vmem:[%s3 + $0x164] sm:$0xf]
  %v1211 = vld [vmem:[%s3 + $0x168] sm:$0xf]
  %v1212 = vld [vmem:[%s3 + $0x16c] sm:$0xf]
  %v1213 = vld [vmem:[%s4 + $0x1b] sm:$0x1]
  %v1214 = vpack.c.bf16 %v1202, %v1201
  %v1215 = vpack.c.bf16 %v1204, %v1203
  %v1216 = vpack.c.bf16 %v1206, %v1205
  %v1217 = vpack.c.bf16 %v1208, %v1207
  %v1218 = vperm.slane %v1213, 0
  %v1223 = vunpack.c.l.b16 %v1209
  %v1224 = vunpack.c.l.b16 %v1210
  %v1225 = vunpack.c.l.b16 %v1211
  %v1226 = vunpack.c.l.b16 %v1212
  %v1227 = vpack.c.b16 %v1224, %v1223
  %v1228 = vpack.c.b16 %v1226, %v1225
  %v1232 = vsel %vm123, %v1214, 0
  %v1235 = vsel %vm123, %v1215, 0
  %v1238 = vsel %vm123, %v1216, 0
  %v1241 = vsel %vm123, %v1217, 0
  %1243 = vmatpush.bf16.msra.mxu0 0
  %1244 = vmatpush.bf16.msra.mxu0 0
  %1245 = vmatpush.bf16.msra.mxu0 0
  %1246 = vmatpush.bf16.msra.mxu0 0
  %1247 = vmatpush.bf16.msra.mxu0 0
  %1248 = vmatpush.bf16.msra.mxu0 0
  %1249 = vmatpush.bf16.msra.mxu0 %v1228
  %1250 = vmatpush.bf16.msra.mxu0 %v1227
  %1251 = vmatmul.bf16.gmra.mxu0 %v1232
  %v1252 = vpop.f32.mrf.mxu0
  %v1253 = vadd.f32 %v1218, %v1252
  %v1254 = vpop.f32.mrf.mxu0
  %v1255 = vadd.f32 %v1218, %v1254
  %1256 = vmatmul.bf16.gmra.mxu0 %v1235
  %v1257 = vpop.f32.mrf.mxu0
  %v1258 = vadd.f32 %v1218, %v1257
  %v1259 = vpop.f32.mrf.mxu0
  %v1260 = vadd.f32 %v1218, %v1259
  %1261 = vmatmul.bf16.gmra.mxu0 %v1238
  %v1262 = vpop.f32.mrf.mxu0
  %v1263 = vadd.f32 %v1218, %v1262
  %v1264 = vpop.f32.mrf.mxu0
  %v1265 = vadd.f32 %v1218, %v1264
  %1266 = vmatmul.bf16.gmra.mxu0 %v1241
  %v1267 = vpop.f32.mrf.mxu0
  %v1268 = vadd.f32 %v1218, %v1267
  %v1269 = vpop.f32.mrf.mxu0
  %v1270 = vadd.f32 %v1218, %v1269
  %1271 = vdwg.mxu0
  %v1272 = vld [vmem:[%s4 + $0x1c] sm:$0x1]
  %v1273 = vld [vmem:[%s4 + $0x1d] sm:$0x1]
  %v1274 = vsel %vm123, %v1253, 0.0
  %1275 = vadd.xlane.f32.xlu0 %v1274
  %v1276 = vpop.xlane.xlu0 %1275
  %v1277 = vsel %vm123, %v1255, 0.0
  %1278 = vadd.xlane.f32.xlu0 %v1277
  %v1279 = vpop.xlane.xlu0 %1278
  %v1280 = vsel %vm123, %v1258, 0.0
  %1281 = vadd.xlane.f32.xlu0 %v1280
  %v1282 = vpop.xlane.xlu0 %1281
  %v1283 = vsel %vm123, %v1260, 0.0
  %1284 = vadd.xlane.f32.xlu0 %v1283
  %v1285 = vpop.xlane.xlu0 %1284
  %v1286 = vsel %vm123, %v1263, 0.0
  %1287 = vadd.xlane.f32.xlu0 %v1286
  %v1288 = vpop.xlane.xlu0 %1287
  %v1289 = vsel %vm123, %v1265, 0.0
  %1290 = vadd.xlane.f32.xlu0 %v1289
  %v1291 = vpop.xlane.xlu0 %1290
  %v1292 = vsel %vm123, %v1268, 0.0
  %1293 = vadd.xlane.f32.xlu0 %v1292
  %v1294 = vpop.xlane.xlu0 %1293
  %v1295 = vsel %vm123, %v1270, 0.0
  %1296 = vadd.xlane.f32.xlu0 %v1295
  %v1297 = vpop.xlane.xlu0 %1296
  %v1298 = vmul.f32 %v1276, %v268
  %v1299 = vmul.f32 %v1279, %v268
  %v1300 = vmul.f32 %v1282, %v268
  %v1301 = vmul.f32 %v1285, %v268
  %v1302 = vmul.f32 %v1288, %v268
  %v1303 = vmul.f32 %v1291, %v268
  %v1304 = vmul.f32 %v1294, %v268
  %v1305 = vmul.f32 %v1297, %v268
  %v1306 = vsub.f32 %v1253, %v1298
  %v1307 = vsub.f32 %v1255, %v1299
  %v1308 = vsub.f32 %v1258, %v1300
  %v1309 = vsub.f32 %v1260, %v1301
  %v1310 = vsub.f32 %v1263, %v1302
  %v1311 = vsub.f32 %v1265, %v1303
  %v1312 = vsub.f32 %v1268, %v1304
  %v1313 = vsub.f32 %v1270, %v1305
  %v1314 = vmul.f32 %v1306, %v1306
  %v1315 = vmul.f32 %v1307, %v1307
  %v1316 = vmul.f32 %v1308, %v1308
  %v1317 = vmul.f32 %v1309, %v1309
  %v1318 = vmul.f32 %v1310, %v1310
  %v1319 = vmul.f32 %v1311, %v1311
  %v1320 = vmul.f32 %v1312, %v1312
  %v1321 = vmul.f32 %v1313, %v1313
  %v1322 = vsel %vm123, %v1314, 0.0
  %1323 = vadd.xlane.f32.xlu0 %v1322
  %v1324 = vpop.xlane.xlu0 %1323
  %v1325 = vsel %vm123, %v1315, 0.0
  %1326 = vadd.xlane.f32.xlu0 %v1325
  %v1327 = vpop.xlane.xlu0 %1326
  %v1328 = vsel %vm123, %v1316, 0.0
  %1329 = vadd.xlane.f32.xlu0 %v1328
  %v1330 = vpop.xlane.xlu0 %1329
  %v1331 = vsel %vm123, %v1317, 0.0
  %1332 = vadd.xlane.f32.xlu0 %v1331
  %v1333 = vpop.xlane.xlu0 %1332
  %v1334 = vsel %vm123, %v1318, 0.0
  %1335 = vadd.xlane.f32.xlu0 %v1334
  %v1336 = vpop.xlane.xlu0 %1335
  %v1337 = vsel %vm123, %v1319, 0.0
  %1338 = vadd.xlane.f32.xlu0 %v1337
  %v1339 = vpop.xlane.xlu0 %1338
  %v1340 = vsel %vm123, %v1320, 0.0
  %1341 = vadd.xlane.f32.xlu0 %v1340
  %v1342 = vpop.xlane.xlu0 %1341
  %v1343 = vsel %vm123, %v1321, 0.0
  %1344 = vadd.xlane.f32.xlu0 %v1343
  %v1345 = vpop.xlane.xlu0 %1344
  %v1346 = vmul.f32 %v1324, %v268
  %v1347 = vmul.f32 %v1327, %v268
  %v1348 = vmul.f32 %v1330, %v268
  %v1349 = vmul.f32 %v1333, %v268
  %v1350 = vmul.f32 %v1336, %v268
  %v1351 = vmul.f32 %v1339, %v268
  %v1352 = vmul.f32 %v1342, %v268
  %v1353 = vmul.f32 %v1345, %v268
  %v1354 = vadd.f32 %v1346, 1e-05
  %v1355 = vadd.f32 %v1347, 1e-05
  %v1356 = vadd.f32 %v1348, 1e-05
  %v1357 = vadd.f32 %v1349, 1e-05
  %v1358 = vadd.f32 %v1350, 1e-05
  %v1359 = vadd.f32 %v1351, 1e-05
  %v1360 = vadd.f32 %v1352, 1e-05
  %v1361 = vadd.f32 %v1353, 1e-05
  %v1362 = vrsqrt.pop %v1354
  %v1363 = vmul.f32 %v1362, %v1354
  %v1364 = vmul.f32 %v1363, %v1362
  %v1365 = vmul.f32 0.5, %v1364
  %v1366 = vsub.f32 1.5, %v1365
  %v1367 = vmul.f32 %v1362, %v1366
  %vm1368 = vweird.f32 %v1354
  %vm1369 = vweird.f32 %v1362
  %vm1370 = vmor %vm1368, %vm1369
  %v1371 = vsel %vm1370, %v1362, %v1367
  %v1372 = vrsqrt.pop %v1355
  %v1373 = vmul.f32 %v1372, %v1355
  %v1374 = vmul.f32 %v1373, %v1372
  %v1375 = vmul.f32 0.5, %v1374
  %v1376 = vsub.f32 1.5, %v1375
  %v1377 = vmul.f32 %v1372, %v1376
  %vm1378 = vweird.f32 %v1355
  %vm1379 = vweird.f32 %v1372
  %vm1380 = vmor %vm1378, %vm1379
  %v1381 = vsel %vm1380, %v1372, %v1377
  %v1382 = vrsqrt.pop %v1356
  %v1383 = vmul.f32 %v1382, %v1356
  %v1384 = vmul.f32 %v1383, %v1382
  %v1385 = vmul.f32 0.5, %v1384
  %v1386 = vsub.f32 1.5, %v1385
  %v1387 = vmul.f32 %v1382, %v1386
  %vm1388 = vweird.f32 %v1356
  %vm1389 = vweird.f32 %v1382
  %vm1390 = vmor %vm1388, %vm1389
  %v1391 = vsel %vm1390, %v1382, %v1387
  %v1392 = vrsqrt.pop %v1357
  %v1393 = vmul.f32 %v1392, %v1357
  %v1394 = vmul.f32 %v1393, %v1392
  %v1395 = vmul.f32 0.5, %v1394
  %v1396 = vsub.f32 1.5, %v1395
  %v1397 = vmul.f32 %v1392, %v1396
  %vm1398 = vweird.f32 %v1357
  %vm1399 = vweird.f32 %v1392
  %vm1400 = vmor %vm1398, %vm1399
  %v1401 = vsel %vm1400, %v1392, %v1397
  %v1402 = vrsqrt.pop %v1358
  %v1403 = vmul.f32 %v1402, %v1358
  %v1404 = vmul.f32 %v1403, %v1402
  %v1405 = vmul.f32 0.5, %v1404
  %v1406 = vsub.f32 1.5, %v1405
  %v1407 = vmul.f32 %v1402, %v1406
  %vm1408 = vweird.f32 %v1358
  %vm1409 = vweird.f32 %v1402
  %vm1410 = vmor %vm1408, %vm1409
  %v1411 = vsel %vm1410, %v1402, %v1407
  %v1412 = vrsqrt.pop %v1359
  %v1413 = vmul.f32 %v1412, %v1359
  %v1414 = vmul.f32 %v1413, %v1412
  %v1415 = vmul.f32 0.5, %v1414
  %v1416 = vsub.f32 1.5, %v1415
  %v1417 = vmul.f32 %v1412, %v1416
  %vm1418 = vweird.f32 %v1359
  %vm1419 = vweird.f32 %v1412
  %vm1420 = vmor %vm1418, %vm1419
  %v1421 = vsel %vm1420, %v1412, %v1417
  %v1422 = vrsqrt.pop %v1360
  %v1423 = vmul.f32 %v1422, %v1360
  %v1424 = vmul.f32 %v1423, %v1422
  %v1425 = vmul.f32 0.5, %v1424
  %v1426 = vsub.f32 1.5, %v1425
  %v1427 = vmul.f32 %v1422, %v1426
  %vm1428 = vweird.f32 %v1360
  %vm1429 = vweird.f32 %v1422
  %vm1430 = vmor %vm1428, %vm1429
  %v1431 = vsel %vm1430, %v1422, %v1427
  %v1432 = vrsqrt.pop %v1361
  %v1433 = vmul.f32 %v1432, %v1361
  %v1434 = vmul.f32 %v1433, %v1432
  %v1435 = vmul.f32 0.5, %v1434
  %v1436 = vsub.f32 1.5, %v1435
  %v1437 = vmul.f32 %v1432, %v1436
  %vm1438 = vweird.f32 %v1361
  %vm1439 = vweird.f32 %v1432
  %vm1440 = vmor %vm1438, %vm1439
  %v1441 = vsel %vm1440, %v1432, %v1437
  %v1442 = vmul.f32 %v1306, %v1371
  %v1443 = vmul.f32 %v1307, %v1381
  %v1444 = vmul.f32 %v1308, %v1391
  %v1445 = vmul.f32 %v1309, %v1401
  %v1446 = vmul.f32 %v1310, %v1411
  %v1447 = vmul.f32 %v1311, %v1421
  %v1448 = vmul.f32 %v1312, %v1431
  %v1449 = vmul.f32 %v1313, %v1441
  %v1450 = vperm.slane %v1272, 0
  %v1451 = vmul.f32 %v1442, %v1450
  %v1452 = vmul.f32 %v1443, %v1450
  %v1453 = vmul.f32 %v1444, %v1450
  %v1454 = vmul.f32 %v1445, %v1450
  %v1455 = vmul.f32 %v1446, %v1450
  %v1456 = vmul.f32 %v1447, %v1450
  %v1457 = vmul.f32 %v1448, %v1450
  %v1458 = vmul.f32 %v1449, %v1450
  %v1459 = vperm.slane %v1273, 0
  %v1460 = vadd.f32 %v1451, %v1459
  %v1461 = vadd.f32 %v1452, %v1459
  %v1462 = vadd.f32 %v1453, %v1459
  %v1463 = vadd.f32 %v1454, %v1459
  %v1464 = vadd.f32 %v1455, %v1459
  %v1465 = vadd.f32 %v1456, %v1459
  %v1466 = vadd.f32 %v1457, %v1459
  %v1467 = vadd.f32 %v1458, %v1459
  %v1468 = vadd.f32 %v962, %v1460
  %v1469 = vadd.f32 %v963, %v1461
  %v1470 = vadd.f32 %v964, %v1462
  %v1471 = vadd.f32 %v965, %v1463
  %v1472 = vadd.f32 %v966, %v1464
  %v1473 = vadd.f32 %v967, %v1465
  %v1474 = vadd.f32 %v968, %v1466
  %v1475 = vadd.f32 %v969, %v1467
  %v1476 = vld [vmem:[%s3 + $0x170] sm:$0xf]
  %v1477 = vld [vmem:[%s3 + $0x174] sm:$0xf]
  %v1478 = vld [vmem:[%s3 + $0x178] sm:$0xf]
  %v1479 = vld [vmem:[%s3 + $0x17c] sm:$0xf]
  %v1480 = vld [vmem:[%s4 + $0x1e] sm:$0x1]
  %v1481 = vpack.c.bf16 %v1469, %v1468
  %v1482 = vpack.c.bf16 %v1471, %v1470
  %v1483 = vpack.c.bf16 %v1473, %v1472
  %v1484 = vpack.c.bf16 %v1475, %v1474
  %v1485 = vperm.slane %v1480, 0
  %v1490 = vunpack.c.l.b16 %v1476
  %v1491 = vunpack.c.l.b16 %v1477
  %v1492 = vunpack.c.l.b16 %v1478
  %v1493 = vunpack.c.l.b16 %v1479
  %v1494 = vpack.c.b16 %v1491, %v1490
  %v1495 = vpack.c.b16 %v1493, %v1492
  %v1499 = vsel %vm123, %v1481, 0
  %v1502 = vsel %vm123, %v1482, 0
  %v1505 = vsel %vm123, %v1483, 0
  %v1508 = vsel %vm123, %v1484, 0
  %1510 = vmatpush.bf16.msra.mxu0 0
  %1511 = vmatpush.bf16.msra.mxu0 0
  %1512 = vmatpush.bf16.msra.mxu0 0
  %1513 = vmatpush.bf16.msra.mxu0 0
  %1514 = vmatpush.bf16.msra.mxu0 0
  %1515 = vmatpush.bf16.msra.mxu0 0
  %1516 = vmatpush.bf16.msra.mxu0 %v1495
  %1517 = vmatpush.bf16.msra.mxu0 %v1494
  %1518 = vmatmul.bf16.gmra.mxu0 %v1499
  %v1519 = vpop.f32.mrf.mxu0
  %v1520 = vadd.f32 %v1485, %v1519
  %v1521 = vpop.f32.mrf.mxu0
  %v1522 = vadd.f32 %v1485, %v1521
  %1523 = vmatmul.bf16.gmra.mxu0 %v1502
  %v1524 = vpop.f32.mrf.mxu0
  %v1525 = vadd.f32 %v1485, %v1524
  %v1526 = vpop.f32.mrf.mxu0
  %v1527 = vadd.f32 %v1485, %v1526
  %1528 = vmatmul.bf16.gmra.mxu0 %v1505
  %v1529 = vpop.f32.mrf.mxu0
  %v1530 = vadd.f32 %v1485, %v1529
  %v1531 = vpop.f32.mrf.mxu0
  %v1532 = vadd.f32 %v1485, %v1531
  %1533 = vmatmul.bf16.gmra.mxu0 %v1508
  %v1534 = vpop.f32.mrf.mxu0
  %v1535 = vadd.f32 %v1485, %v1534
  %v1536 = vpop.f32.mrf.mxu0
  %v1537 = vadd.f32 %v1485, %v1536
  %1538 = vdwg.mxu0
  %v1539 = vmax.f32 %v1520, 0.0
  %v1540 = vmax.f32 %v1522, 0.0
  %v1541 = vmax.f32 %v1525, 0.0
  %v1542 = vmax.f32 %v1527, 0.0
  %v1543 = vmax.f32 %v1530, 0.0
  %v1544 = vmax.f32 %v1532, 0.0
  %v1545 = vmax.f32 %v1535, 0.0
  %v1546 = vmax.f32 %v1537, 0.0
  %v1547 = vld [vmem:[%s3 + $0x180] sm:$0xf]
  %v1548 = vld [vmem:[%s3 + $0x184] sm:$0xf]
  %v1549 = vld [vmem:[%s3 + $0x188] sm:$0xf]
  %v1550 = vld [vmem:[%s3 + $0x18c] sm:$0xf]
  %v1551 = vld [vmem:[%s3 + $0x190] sm:$0xf]
  %v1552 = vld [vmem:[%s3 + $0x194] sm:$0xf]
  %v1553 = vld [vmem:[%s3 + $0x198] sm:$0xf]
  %v1554 = vld [vmem:[%s3 + $0x19c] sm:$0xf]
  %v1555 = vld [vmem:[%s4 + $0x1f] sm:$0x1]
  %v1556 = vpack.c.bf16 %v1540, %v1539
  %v1557 = vpack.c.bf16 %v1542, %v1541
  %v1558 = vpack.c.bf16 %v1544, %v1543
  %v1559 = vpack.c.bf16 %v1546, %v1545
  %v1560 = vperm.slane %v1555, 0
  %v1569 = vunpack.c.l.b16 %v1547
  %v1570 = vunpack.c.l.b16 %v1548
  %v1571 = vunpack.c.l.b16 %v1549
  %v1572 = vunpack.c.l.b16 %v1550
  %v1573 = vunpack.c.l.b16 %v1551
  %v1574 = vunpack.c.l.b16 %v1552
  %v1575 = vunpack.c.l.b16 %v1553
  %v1576 = vunpack.c.l.b16 %v1554
  %v1577 = vpack.c.b16 %v1570, %v1569
  %v1578 = vpack.c.b16 %v1572, %v1571
  %v1579 = vpack.c.b16 %v1574, %v1573
  %v1580 = vpack.c.b16 %v1576, %v1575
  %v1586 = vsel %vm439, %v1556, 0
  %v1589 = vsel %vm439, %v1557, 0
  %v1592 = vsel %vm439, %v1558, 0
  %v1595 = vsel %vm439, %v1559, 0
  %1597 = vmatpush.bf16.msra.mxu0 0
  %1598 = vmatpush.bf16.msra.mxu0 0
  %1599 = vmatpush.bf16.msra.mxu0 0
  %1600 = vmatpush.bf16.msra.mxu0 0
  %1601 = vmatpush.bf16.msra.mxu0 %v1580
  %1602 = vmatpush.bf16.msra.mxu0 %v1579
  %1603 = vmatpush.bf16.msra.mxu0 %v1578
  %1604 = vmatpush.bf16.msra.mxu0 %v1577
  %1605 = vmatmul.bf16.gmra.mxu0 %v1586
  %v1606 = vpop.f32.mrf.mxu0
  %v1607 = vadd.f32 %v1560, %v1606
  %v1608 = vpop.f32.mrf.mxu0
  %v1609 = vadd.f32 %v1560, %v1608
  %1610 = vmatmul.bf16.gmra.mxu0 %v1589
  %v1611 = vpop.f32.mrf.mxu0
  %v1612 = vadd.f32 %v1560, %v1611
  %v1613 = vpop.f32.mrf.mxu0
  %v1614 = vadd.f32 %v1560, %v1613
  %1615 = vmatmul.bf16.gmra.mxu0 %v1592
  %v1616 = vpop.f32.mrf.mxu0
  %v1617 = vadd.f32 %v1560, %v1616
  %v1618 = vpop.f32.mrf.mxu0
  %v1619 = vadd.f32 %v1560, %v1618
  %1620 = vmatmul.bf16.gmra.mxu0 %v1595
  %v1621 = vpop.f32.mrf.mxu0
  %v1622 = vadd.f32 %v1560, %v1621
  %v1623 = vpop.f32.mrf.mxu0
  %v1624 = vadd.f32 %v1560, %v1623
  %1625 = vdwg.mxu0
  %v1626 = vmax.f32 %v1607, 0.0
  %v1627 = vmax.f32 %v1609, 0.0
  %v1628 = vmax.f32 %v1612, 0.0
  %v1629 = vmax.f32 %v1614, 0.0
  %v1630 = vmax.f32 %v1617, 0.0
  %v1631 = vmax.f32 %v1619, 0.0
  %v1632 = vmax.f32 %v1622, 0.0
  %v1633 = vmax.f32 %v1624, 0.0
  %v1634 = vld [vmem:[%s3 + $0x1a0] sm:$0xf]
  %v1635 = vld [vmem:[%s3 + $0x1a4] sm:$0xf]
  %v1636 = vld [vmem:[%s3 + $0x1a8] sm:$0xf]
  %v1637 = vld [vmem:[%s3 + $0x1ac] sm:$0xf]
  %v1638 = vld [vmem:[%s3 + $0x1b0] sm:$0xf]
  %v1639 = vld [vmem:[%s3 + $0x1b4] sm:$0xf]
  %v1640 = vld [vmem:[%s3 + $0x1b8] sm:$0xf]
  %v1641 = vld [vmem:[%s3 + $0x1bc] sm:$0xf]
  %v1642 = vld [vmem:[%s4 + $0x20] sm:$0x1]
  %v1643 = vpack.c.bf16 %v1627, %v1626
  %v1644 = vpack.c.bf16 %v1629, %v1628
  %v1645 = vpack.c.bf16 %v1631, %v1630
  %v1646 = vpack.c.bf16 %v1633, %v1632
  %v1647 = vperm.slane %v1642, 0
  %v1656 = vunpack.c.l.b16 %v1634
  %v1657 = vunpack.c.l.b16 %v1635
  %v1658 = vunpack.c.l.b16 %v1636
  %v1659 = vunpack.c.l.b16 %v1637
  %v1660 = vunpack.c.l.b16 %v1638
  %v1661 = vunpack.c.l.b16 %v1639
  %v1662 = vunpack.c.l.b16 %v1640
  %v1663 = vunpack.c.l.b16 %v1641
  %v1664 = vpack.c.b16 %v1657, %v1656
  %v1665 = vpack.c.b16 %v1659, %v1658
  %v1666 = vpack.c.b16 %v1661, %v1660
  %v1667 = vpack.c.b16 %v1663, %v1662
  %v1673 = vsel %vm439, %v1643, 0
  %v1676 = vsel %vm439, %v1644, 0
  %v1679 = vsel %vm439, %v1645, 0
  %v1682 = vsel %vm439, %v1646, 0
  %1684 = vmatpush.bf16.msra.mxu0 0
  %1685 = vmatpush.bf16.msra.mxu0 0
  %1686 = vmatpush.bf16.msra.mxu0 0
  %1687 = vmatpush.bf16.msra.mxu0 0
  %1688 = vmatpush.bf16.msra.mxu0 %v1667
  %1689 = vmatpush.bf16.msra.mxu0 %v1666
  %1690 = vmatpush.bf16.msra.mxu0 %v1665
  %1691 = vmatpush.bf16.msra.mxu0 %v1664
  %1692 = vmatmul.bf16.gmra.mxu0 %v1673
  %v1693 = vpop.f32.mrf.mxu0
  %v1694 = vadd.f32 %v1647, %v1693
  %v1695 = vpop.f32.mrf.mxu0
  %v1696 = vadd.f32 %v1647, %v1695
  %1697 = vmatmul.bf16.gmra.mxu0 %v1676
  %v1698 = vpop.f32.mrf.mxu0
  %v1699 = vadd.f32 %v1647, %v1698
  %v1700 = vpop.f32.mrf.mxu0
  %v1701 = vadd.f32 %v1647, %v1700
  %1702 = vmatmul.bf16.gmra.mxu0 %v1679
  %v1703 = vpop.f32.mrf.mxu0
  %v1704 = vadd.f32 %v1647, %v1703
  %v1705 = vpop.f32.mrf.mxu0
  %v1706 = vadd.f32 %v1647, %v1705
  %1707 = vmatmul.bf16.gmra.mxu0 %v1682
  %v1708 = vpop.f32.mrf.mxu0
  %v1709 = vadd.f32 %v1647, %v1708
  %v1710 = vpop.f32.mrf.mxu0
  %v1711 = vadd.f32 %v1647, %v1710
  %1712 = vdwg.mxu0
  %1713 = vst [vmem:[%s5] sm:$0xff] %v1694
  %1714 = vst [vmem:[%s5 + $0x8] sm:$0xff] %v1696
  %1715 = vst [vmem:[%s5 + $0x10] sm:$0xff] %v1699
  %1716 = vst [vmem:[%s5 + $0x18] sm:$0xff] %v1701
  %1717 = vst [vmem:[%s5 + $0x20] sm:$0xff] %v1704
  %1718 = vst [vmem:[%s5 + $0x28] sm:$0xff] %v1706
  %1719 = vst [vmem:[%s5 + $0x30] sm:$0xff] %v1709
  %1720 = vst [vmem:[%s5 + $0x38] sm:$0xff] %v1711
  // Predicated region
  $region22: #{forward.1} parent=0 // pred_check
    _
  $region23: #{forward.1} parent=0 // pred_check_branch
    %1722 = sbr.rel (0) target = $region25
  $region24: #{forward.1} parent=0 // pred_region
    _
  $region25: #{forward.1} parent=0 // pred_fallthru
    _
  // Predicated region
  $region26: #{forward.1} parent=0 // pred_check
    _
  $region27: #{forward.1} parent=0 // pred_check_branch
    %1724 = sbr.rel (0) target = $region29
  $region28: #{forward.1} parent=0 // pred_region
    _
  $region29: #{forward.1} parent=0 // pred_fallthru
    _

</llo_original>
